<compile_context>
chip_gen: v7x
topology: tpu7x:2x2x1
jax: 0.10.0
libtpu: 0.0.40
codegen_flags: <defaults>
</compile_context>

<pallas_src>
import math
import functools

import jax
import jax.numpy as jnp
import numpy as np
from jax import lax
from jax.experimental import pallas as pl
from jax.experimental.pallas import tpu as pltpu


MASK_VALUE = -1e30


# ----------------------------------------------------------------------------- helpers
def normalization_groups(channels: int) -> int:
    """Mirror of `normalization()` group selection in the PyTorch module."""
    groups = 32
    if channels <= 16:
        groups = 8
    elif channels <= 64:
        groups = 16
    while channels % groups != 0:
        groups = int(groups / 2)
    assert groups > 2
    return groups


def _pick_tile(total: int, cap: int) -> int:
    """Largest multiple-of-128 divisor of `total` that is <= cap (total % 128 == 0)."""
    t = cap
    while t > 128:
        if total % t == 0:
            return t
        t -= 128
    return 128


def _pick_head_block(n_heads: int, ch: int, *, target: int = 256, max_unroll: int = 16) -> int:
    """Smallest divisor of n_heads with Hblk*ch >= target, else largest divisor <= max_unroll."""
    best = 1
    for d in range(1, n_heads + 1):
        if n_heads % d != 0 or d > max_unroll:
            continue
        best = d
        if d * ch >= target:
            break
    return best


def _vmem_budget():
    """(physical VMEM bytes, per-call vmem_limit_bytes) — generation aware."""
    try:
        cap = pltpu.get_tpu_info().vmem_capacity_bytes
    except Exception:
        cap = 64 * 1024 * 1024
    return cap, (cap * 3) // 4          # 48 MiB on v7x, 96 MiB on v5e/v6e


# ----------------------------------------------------------------------------- kernels
def _fused_gn_qkv_kernel(x_ref, ind_ref, indt_ref, gwb_ref,
                         wq_ref, wk_ref, wv_ref, bq_ref, bk_ref, bv_ref,
                         q_ref, k_ref, v_ref, *, cg, t_real, eps, needs_mask):
    """GroupNorm (two-pass, whole-T resident) + QKV projection for one batch element."""
    x = x_ref[0]                                   # (C, Tpad) f32, zero-padded lanes
    ind = ind_ref[...]                             # (G, C) 0/1 indicator
    indt = indt_ref[...]                           # (C, G)
    inv_n = 1.0 / float(cg * t_real)               # divisor uses the REAL seq length

    # pass 1: per-group mean (zero-padded lanes drop out of the sum automatically)
    gsum = jnp.dot(ind, x, preferred_element_type=jnp.float32)            # (G, Tpad)
    mean_g = jnp.sum(gsum, axis=-1, keepdims=True) * inv_n                # (G, 1)
    mean_c = jnp.dot(indt, mean_g, preferred_element_type=jnp.float32)    # (C, 1)

    # pass 2: centered second moment — (x - mean)^2 form, padded lanes masked out
    d = x - mean_c                                                        # (C, Tpad)
    if needs_mask:
        lane = lax.broadcasted_iota(jnp.int32, d.shape, 1)
        d = jnp.where(lane < t_real, d, 0.0)
    gsq = jnp.dot(ind, d * d, preferred_element_type=jnp.float32)         # (G, Tpad)
    var_g = jnp.sum(gsq, axis=-1, keepdims=True) * inv_n                  # (G, 1)
    rstd_c = jnp.dot(indt, lax.rsqrt(var_g + eps),
                     preferred_element_type=jnp.float32)                  # (C, 1)

    gamma = gwb_ref[:, 0:1]
    beta = gwb_ref[:, 1:2]
    xn = (d * (rstd_c * gamma) + beta).astype(jnp.bfloat16)               # (C, Tpad) bf16

    # Three separate dots writing straight into q/k/v (no (3C, T) f32 intermediate).
    # Attention scale 1/sqrt(sqrt(ch)) is already folded into wq/wk/bq/bk host-side.
    q_ref[0] = (jnp.dot(wq_ref[...], xn, preferred_element_type=jnp.float32)
                + bq_ref[...]).astype(jnp.bfloat16)
    k_ref[0] = (jnp.dot(wk_ref[...], xn, preferred_element_type=jnp.float32)
                + bk_ref[...]).astype(jnp.bfloat16)
    v_ref[0] = (jnp.dot(wv_ref[...], xn, preferred_element_type=jnp.float32)
                + bv_ref[...]).astype(jnp.bfloat16)


def _gn_stats_kernel(x_ref, ind_ref, indt_ref, stats_ref, sum_sc, sq_sc, *,
                     cg, t_real, eps):
    """Fallback (large C*T): streaming per-group sum / sum-of-squares over T tiles."""
    t = pl.program_id(1)

    @pl.when(t == 0)
    def _():
        sum_sc[...] = jnp.zeros_like(sum_sc)
        sq_sc[...] = jnp.zeros_like(sq_sc)

    x = x_ref[0]                                   # (C, Tt) f32, zero-padded lanes
    ind = ind_ref[...]                             # (G, C)
    gsum = jnp.dot(ind, x, preferred_element_type=jnp.float32)
    gsq = jnp.dot(ind, x * x, preferred_element_type=jnp.float32)
    sum_sc[...] += jnp.sum(gsum, axis=-1, keepdims=True)
    sq_sc[...] += jnp.sum(gsq, axis=-1, keepdims=True)

    @pl.when(t == pl.num_programs(1) - 1)
    def _():
        inv_n = 1.0 / float(cg * t_real)
        mean_g = sum_sc[...] * inv_n
        var_g = jnp.maximum(sq_sc[...] * inv_n - mean_g * mean_g, 0.0)
        rstd_g = lax.rsqrt(var_g + eps)
        stats_ref[0, :, 0:1] = jnp.dot(ind_ref[...].T * 0.0 + indt_ref[...], mean_g,
                                       preferred_element_type=jnp.float32) * 0.0 + \
            jnp.dot(indt_ref[...], mean_g, preferred_element_type=jnp.float32)
        stats_ref[0, :, 1:2] = jnp.dot(indt_ref[...], rstd_g,
                                       preferred_element_type=jnp.float32)


def _norm_qkv_kernel(x_ref, stats_ref, gwb_ref, wq_ref, wk_ref, wv_ref,
                     bq_ref, bk_ref, bv_ref, q_ref, k_ref, v_ref):
    """Fallback: apply precomputed GroupNorm stats + QKV projection for one (b, T-tile)."""
    x = x_ref[0]                                   # (C, Tt) f32
    mean_c = stats_ref[0, :, 0:1]
    rstd_c = stats_ref[0, :, 1:2]
    gamma = gwb_ref[:, 0:1]
    beta = gwb_ref[:, 1:2]
    scale_c = rstd_c * gamma
    shift_c = beta - mean_c * scale_c
    xn = (x * scale_c + shift_c).astype(jnp.bfloat16)
    q_ref[0] = (jnp.dot(wq_ref[...], xn, preferred_element_type=jnp.float32)
                + bq_ref[...]).astype(jnp.bfloat16)
    k_ref[0] = (jnp.dot(wk_ref[...], xn, preferred_element_type=jnp.float32)
                + bk_ref[...]).astype(jnp.bfloat16)
    v_ref[0] = (jnp.dot(wv_ref[...], xn, preferred_element_type=jnp.float32)
                + bv_ref[...]).astype(jnp.bfloat16)


def _flash_attn_kernel(q_ref, k_ref, v_ref, o_ref, m_sc, l_sc, acc_sc, *,
                       hblk, t_real, kv_tile, needs_mask):
    """Online-softmax attention for Hblk heads of one (batch, q-tile); reduces over kv tiles."""
    ki = pl.program_id(2)

    @pl.when(ki == 0)
    def _():
        m_sc[...] = jnp.full_like(m_sc, MASK_VALUE)
        l_sc[...] = jnp.zeros_like(l_sc)
        acc_sc[...] = jnp.zeros_like(acc_sc)

    if needs_mask:
        # Only the tail KV tile can contain padded keys (padding < Tk is asserted in the
        # wrapper, so a fully-masked tile never occurs). Gate the mask behind a scalar
        # predicate so the hot KV loop pays nothing on full tiles.
        is_tail = (ki + 1) * kv_tile > t_real

    for h in range(hblk):                          # unrolled head batch — keeps MXU fed
        q = q_ref[0, h]                            # (ch, Tq) bf16 (scale folded in)
        k = k_ref[0, h]                            # (ch, Tk) bf16 (scale folded in)
        v = v_ref[0, h]                            # (ch, Tk) bf16

        # Scores laid out (Tk, Tq): s[s_idx, t] = sum_c k[c, s] * q[c, t]
        s = lax.dot_general(k, q, (((0,), (0,)), ((), ())),
                            preferred_element_type=jnp.float32)          # (Tk, Tq) f32
        if needs_mask:
            def _mask(sv):
                key_idx = lax.broadcasted_iota(jnp.int32, sv.shape, 0) + ki * kv_tile
                return jnp.where(key_idx < t_real, sv, MASK_VALUE)
            s = lax.cond(is_tail, _mask, lambda sv: sv, s)

        m_prev = m_sc[h]                                                  # (1, Tq)
        m_new = jnp.maximum(m_prev, jnp.max(s, axis=0, keepdims=True))
        alpha = jnp.exp(m_prev - m_new)
        p = jnp.exp(s - m_new)                                            # (Tk, Tq) f32
        l_sc[h] = alpha * l_sc[h] + jnp.sum(p, axis=0, keepdims=True)
        acc_sc[h] = alpha * acc_sc[h] + lax.dot_general(
            v, p.astype(jnp.bfloat16), (((1,), (0,)), ((), ())),
            preferred_element_type=jnp.float32)                           # (ch, Tq)
        m_sc[h] = m_new

    @pl.when(ki == pl.num_programs(2) - 1)
    def _():
        for h in range(hblk):
            o_ref[0, h] = (acc_sc[h] * pl.reciprocal(l_sc[h], approx=True)
                           ).astype(o_ref.dtype)


def _proj_residual_kernel(x_ref, attn_ref, wp_ref, bp_ref, out_ref):
    """out = x + proj_out(attn) for one (batch, T-tile)."""
    h = jnp.dot(wp_ref[...], attn_ref[0], preferred_element_type=jnp.float32)
    out_ref[0] = x_ref[0] + h + bp_ref[...]


# ----------------------------------------------------------------------------- wrapper
def attention_block_forward(x, params, n_heads, *, eps=1e-5):
    """x: [B, C, *spatial]; returns f32 output of the same shape."""
    B, C = x.shape[0], x.shape[1]
    spatial = x.shape[2:]
    T = int(np.prod(spatial)) if spatial else 1
    G = normalization_groups(C)
    cg = C // G
    H = n_heads
    assert C % H == 0
    ch = C // H

    Tpad = ((T + 127) // 128) * 128                # lane-dense (multiple of 128)
    needs_mask = Tpad != T
    xf = jnp.asarray(x, jnp.float32).reshape(B, C, T)
    if needs_mask:
        xf = jnp.pad(xf, ((0, 0), (0, 0), (0, Tpad - T)))

    vmem_cap, vmem_limit = _vmem_budget()
    big_vmem = vmem_cap >= 100 * 1024 * 1024       # v5e/v6e (128 MiB) vs v7x (64 MiB)

    # ---- host-side constant prep ----
    ind_np = np.zeros((G, C), dtype=np.float32)    # group indicator
    for c in range(C):
        ind_np[c // cg, c] = 1.0
    ind = jnp.asarray(ind_np)
    indt = jnp.asarray(ind_np.T)

    gwb = jnp.stack([jnp.asarray(params["norm_w"], jnp.float32),
                     jnp.asarray(params["norm_b"], jnp.float32)], axis=1)       # (C, 2)

    # QKVAttentionLegacy expects per-head interleaved rows [q_h | k_h | v_h]; split the
    # conv weight into head-major Wq/Wk/Wv blocks and fold 1/sqrt(sqrt(ch)) into Q and K.
    scale = 1.0 / math.sqrt(math.sqrt(ch))
    wqkv = jnp.asarray(params["qkv_w"], jnp.float32).reshape(H, 3, ch, C)
    bqkv = jnp.asarray(params["qkv_b"], jnp.float32).reshape(H, 3, ch)
    wq = (wqkv[:, 0].reshape(C, C) * scale).astype(jnp.bfloat16)
    wk = (wqkv[:, 1].reshape(C, C) * scale).astype(jnp.bfloat16)
    wv = wqkv[:, 2].reshape(C, C).astype(jnp.bfloat16)
    bq = (bqkv[:, 0].reshape(C, 1) * scale).astype(jnp.float32)
    bk = (bqkv[:, 1].reshape(C, 1) * scale).astype(jnp.float32)
    bv = bqkv[:, 2].reshape(C, 1).astype(jnp.float32)

    wp = jnp.asarray(params["proj_w"], jnp.float32).astype(jnp.bfloat16)         # (C, C)
    bp = jnp.asarray(params["proj_b"], jnp.float32).reshape(C, 1)

    # ---- generation-aware tiles ----
    Tt = _pick_tile(Tpad, 1024 if big_vmem else 512)   # elementwise / projection tile
    Tq = _pick_tile(Tpad, 256)                         # flash query tile
    Tk = _pick_tile(Tpad, 1024 if big_vmem else 512)   # flash kv tile (enlarged)
    assert Tpad - T < Tk, "tail KV tile must always contain at least one valid key"
    nT, nQ, nK = Tpad // Tt, Tpad // Tq, Tpad // Tk
    Hblk = _pick_head_block(H, ch, target=256 if big_vmem else 128)
    nHg = H // Hblk

    qkv_shape = jax.ShapeDtypeStruct((B, C, Tpad), jnp.bfloat16)

    # ---------------- 1) GroupNorm + QKV projection ----------------
    # Fused single-pass (x read from HBM once) whenever the per-batch slab fits VMEM.
    fused_bytes = (2 * (C * Tpad * 4 + 3 * C * Tpad * 2)   # double-buffered x + q/k/v
                   + 2 * 3 * C * C * 2                      # double-buffered weights
                   + 6 * C * Tpad * 4)                      # in-kernel f32 temporaries
    if fused_bytes <= (vmem_limit * 7) // 10:
        q, k, v = pl.pallas_call(
            functools.partial(_fused_gn_qkv_kernel, cg=cg, t_real=T, eps=eps,
                              needs_mask=needs_mask),
            grid=(B,),
            in_specs=[
                pl.BlockSpec((1, C, Tpad), lambda b: (b, 0, 0)),
                pl.BlockSpec((G, C), lambda b: (0, 0)),
                pl.BlockSpec((C, G), lambda b: (0, 0)),
                pl.BlockSpec((C, 2), lambda b: (0, 0)),
                pl.BlockSpec((C, C), lambda b: (0, 0)),
                pl.BlockSpec((C, C), lambda b: (0, 0)),
                pl.BlockSpec((C, C), lambda b: (0, 0)),
                pl.BlockSpec((C, 1), lambda b: (0, 0)),
                pl.BlockSpec((C, 1), lambda b: (0, 0)),
                pl.BlockSpec((C, 1), lambda b: (0, 0)),
            ],
            out_specs=[pl.BlockSpec((1, C, Tpad), lambda b: (b, 0, 0))] * 3,
            out_shape=[qkv_shape] * 3,
            compiler_params=pltpu.CompilerParams(
                dimension_semantics=("parallel",),
                vmem_limit_bytes=vmem_limit),
        )(xf, ind, indt, gwb, wq, wk, wv, bq, bk, bv)
    else:
        # Fallback for very large C*T: streaming stats (reduction over T) + tiled apply.
        stats = pl.pallas_call(
            functools.partial(_gn_stats_kernel, cg=cg, t_real=T, eps=eps),
            grid=(B, nT),
            in_specs=[
                pl.BlockSpec((1, C, Tt), lambda b, t: (b, 0, t)),
                pl.BlockSpec((G, C), lambda b, t: (0, 0)),
                pl.BlockSpec((C, G), lambda b, t: (0, 0)),
            ],
            out_specs=pl.BlockSpec((1, C, 2), lambda b, t: (b, 0, 0)),
            out_shape=jax.ShapeDtypeStruct((B, C, 2), jnp.float32),
            scratch_shapes=[pltpu.VMEM((G, 1), jnp.float32),
                            pltpu.VMEM((G, 1), jnp.float32)],
            compiler_params=pltpu.CompilerParams(
                dimension_semantics=("parallel", "arbitrary"),
                vmem_limit_bytes=vmem_limit),
        )(xf, ind, indt)
        q, k, v = pl.pallas_call(
            _norm_qkv_kernel,
            grid=(B * nT,),
            in_specs=[
                pl.BlockSpec((1, C, Tt), lambda i: (i // nT, 0, i % nT)),
                pl.BlockSpec((1, C, 2), lambda i: (i // nT, 0, 0)),
                pl.BlockSpec((C, 2), lambda i: (0, 0)),
                pl.BlockSpec((C, C), lambda i: (0, 0)),
                pl.BlockSpec((C, C), lambda i: (0, 0)),
                pl.BlockSpec((C, C), lambda i: (0, 0)),
                pl.BlockSpec((C, 1), lambda i: (0, 0)),
                pl.BlockSpec((C, 1), lambda i: (0, 0)),
                pl.BlockSpec((C, 1), lambda i: (0, 0)),
            ],
            out_specs=[pl.BlockSpec((1, C, Tt), lambda i: (i // nT, 0, i % nT))] * 3,
            out_shape=[qkv_shape] * 3,
            compiler_params=pltpu.CompilerParams(
                dimension_semantics=("parallel",),
                vmem_limit_bytes=vmem_limit),
        )(xf, stats, gwb, wq, wk, wv, bq, bk, bv)

    # Head-major 4-D view so per-head blocks use full dims on the last two axes.
    q4 = q.reshape(B, H, ch, Tpad)
    k4 = k.reshape(B, H, ch, Tpad)
    v4 = v.reshape(B, H, ch, Tpad)

    # ---------------- 2) flash attention: (batch*head-group, q-tile, kv-tile) ----------
    attn = pl.pallas_call(
        functools.partial(_flash_attn_kernel, hblk=Hblk, t_real=T, kv_tile=Tk,
                          needs_mask=needs_mask),
        grid=(B * nHg, nQ, nK),
        in_specs=[
            pl.BlockSpec((1, Hblk, ch, Tq),
                         lambda g, qi, ki: (g // nHg, g % nHg, 0, qi)),
            pl.BlockSpec((1, Hblk, ch, Tk),
                         lambda g, qi, ki: (g // nHg, g % nHg, 0, ki)),
            pl.BlockSpec((1, Hblk, ch, Tk),
                         lambda g, qi, ki: (g // nHg, g % nHg, 0, ki)),
        ],
        out_specs=pl.BlockSpec((1, Hblk, ch, Tq),
                               lambda g, qi, ki: (g // nHg, g % nHg, 0, qi)),
        out_shape=jax.ShapeDtypeStruct((B, H, ch, Tpad), jnp.bfloat16),
        scratch_shapes=[pltpu.VMEM((Hblk, 1, Tq), jnp.float32),
                        pltpu.VMEM((Hblk, 1, Tq), jnp.float32),
                        pltpu.VMEM((Hblk, ch, Tq), jnp.float32)],
        compiler_params=pltpu.CompilerParams(
            dimension_semantics=("parallel", "parallel", "arbitrary"),
            vmem_limit_bytes=vmem_limit),
    )(q4, k4, v4)
    attn = attn.reshape(B, C, Tpad)                # channel order h*ch + c == original

    # ---------------- 3) proj_out (zero-initialized 1x1 conv) + residual ---------------
    out = pl.pallas_call(
        _proj_residual_kernel,
        grid=(B * nT,),
        in_specs=[
            pl.BlockSpec((1, C, Tt), lambda i: (i // nT, 0, i % nT)),
            pl.BlockSpec((1, C, Tt), lambda i: (i // nT, 0, i % nT)),
            pl.BlockSpec((C, C), lambda i: (0, 0)),
            pl.BlockSpec((C, 1), lambda i: (0, 0)),
        ],
        out_specs=pl.BlockSpec((1, C, Tt), lambda i: (i // nT, 0, i % nT)),
        out_shape=jax.ShapeDtypeStruct((B, C, Tpad), jnp.float32),
        compiler_params=pltpu.CompilerParams(
            dimension_semantics=("parallel",),
            vmem_limit_bytes=vmem_limit),
    )(xf, attn, wp, bp)

    out = out[:, :, :T]                            # drop padded lanes
    return out.reshape(B, C, *spatial)


# ----------------------------------------------------------------------------- reference
def reference_forward(x, params, n_heads, eps=1e-5):
    """Pure-JAX f32 re-implementation of AttentionBlock.forward for verification."""
    B, C = x.shape[0], x.shape[1]
    spatial = x.shape[2:]
    T = int(np.prod(spatial)) if spatial else 1
    G = normalization_groups(C)

    xf = x.reshape(B, C, T).astype(jnp.float32)
    xg = xf.reshape(B, G, -1)
    mean = xg.mean(-1, keepdims=True)
    var = ((xg - mean) ** 2).mean(-1, keepdims=True)
    xn = ((xg - mean) / jnp.sqrt(var + eps)).reshape(B, C, T)
    xn = xn * params["norm_w"][None, :, None] + params["norm_b"][None, :, None]

    qkv = jnp.einsum("oc,bct->bot", params["qkv_w"], xn) + params["qkv_b"][None, :, None]
    ch = C // n_heads
    qkv = qkv.reshape(B * n_heads, 3 * ch, T)
    q, k, v = qkv[:, :ch], qkv[:, ch:2 * ch], qkv[:, 2 * ch:]
    scale = 1.0 / math.sqrt(math.sqrt(ch))
    w = jnp.einsum("bct,bcs->bts", q * scale, k * scale)
    w = jax.nn.softmax(w.astype(jnp.float32), axis=-1)
    a = jnp.einsum("bts,bcs->bct", w, v).reshape(B, C, T)

    h = jnp.einsum("oc,bct->bot", params["proj_w"], a) + params["proj_b"][None, :, None]
    out = (xf + h).reshape(B, C, *spatial)
    return out, h.reshape(B, C, *spatial)


# ----------------------------------------------------------------------------- main
if __name__ == "__main__":
    # Small config consistent with the module: channels=32 -> GroupNorm groups=16,
    # num_heads=4 -> 8 channels/head, spatial 8x8 -> T=64 (padded to 128 lanes).
    B, C, Hs, Ws = 2, 32, 8, 8
    NUM_HEADS = 4

    key = jax.random.PRNGKey(0)
    ks = jax.random.split(key, 6)
    x = jax.random.normal(ks[0], (B, C, Hs, Ws), dtype=jnp.float32)

    params = {
        # GroupNorm32 affine params (perturbed so the normalization path is exercised).
        "norm_w": 1.0 + 0.1 * jax.random.normal(ks[1], (C,), dtype=jnp.float32),
        "norm_b": 0.1 * jax.random.normal(ks[2], (C,), dtype=jnp.float32),
        # qkv: nn.Conv1d(C, 3C, 1)
        "qkv_w": 0.05 * jax.random.normal(ks[3], (3 * C, C), dtype=jnp.float32),
        "qkv_b": 0.05 * jax.random.normal(ks[4], (3 * C,), dtype=jnp.float32),
        # proj_out is zero_module()-initialized in the real module; non-zero here so the
        # verification covers the full attention path (exact-identity check below).
        "proj_w": 0.2 * jax.random.normal(ks[5], (C, C), dtype=jnp.float32),
        "proj_b": 0.02 * jnp.ones((C,), jnp.float32),
    }

    out = jax.block_until_ready(attention_block_forward(x, params, NUM_HEADS))
    ref_out, ref_h = reference_forward(x, params, NUM_HEADS)

    # Full output (bf16 MXU operands -> loose tolerance vs f32 reference).
    np.testing.assert_allclose(np.asarray(out), np.asarray(ref_out), rtol=2e-2, atol=2e-2)
    # Attention increment (out - x) so the residual term cannot mask attention errors.
    np.testing.assert_allclose(np.asarray(out) - np.asarray(x), np.asarray(ref_h),
                               rtol=2e-1, atol=1e-2)

    # zero_module(proj_out) default init => forward is an exact identity.
    params_zero = dict(params,
                       proj_w=jnp.zeros((C, C), jnp.float32),
                       proj_b=jnp.zeros((C,), jnp.float32))
    out_zero = jax.block_until_ready(attention_block_forward(x, params_zero, NUM_HEADS))
    np.testing.assert_allclose(np.asarray(out_zero), np.asarray(x), rtol=1e-6, atol=1e-6)

    print("KERNEL_OK")
</pallas_src>

<mosaic_0001>
module attributes {stable_mosaic.version = 11 : i64} {
  func.func @_fused_gn_qkv_kernel(%arg0: i32, %arg1: memref<1x32x128xf32, #tpu.memory_space<vmem>>, %arg2: memref<16x32xf32, #tpu.memory_space<vmem>>, %arg3: memref<32x16xf32, #tpu.memory_space<vmem>>, %arg4: memref<32x2xf32, #tpu.memory_space<vmem>>, %arg5: memref<32x32xbf16, #tpu.memory_space<vmem>>, %arg6: memref<32x32xbf16, #tpu.memory_space<vmem>>, %arg7: memref<32x32xbf16, #tpu.memory_space<vmem>>, %arg8: memref<32x1xf32, #tpu.memory_space<vmem>>, %arg9: memref<32x1xf32, #tpu.memory_space<vmem>>, %arg10: memref<32x1xf32, #tpu.memory_space<vmem>>, %arg11: memref<1x32x128xbf16, #tpu.memory_space<vmem>>, %arg12: memref<1x32x128xbf16, #tpu.memory_space<vmem>>, %arg13: memref<1x32x128xbf16, #tpu.memory_space<vmem>>) attributes {dimension_semantics = [#tpu.dimension_semantics<parallel>], iteration_bounds = array<i64: 2>, scalar_prefetch = 0 : i64, scratch_operands = 0 : i64, tpu.core_type = #tpu.core_type<tc>, window_params = [{transform_indices = @transform_0, window_bounds = array<i64: 1, 32, 128>}, {pipeline_mode = #tpu.pipeline_mode<synchronous>, transform_indices = @transform_1, window_bounds = array<i64: 16, 32>}, {pipeline_mode = #tpu.pipeline_mode<synchronous>, transform_indices = @transform_2, window_bounds = array<i64: 32, 16>}, {pipeline_mode = #tpu.pipeline_mode<synchronous>, transform_indices = @transform_3, window_bounds = array<i64: 32, 2>}, {pipeline_mode = #tpu.pipeline_mode<synchronous>, transform_indices = @transform_4, window_bounds = array<i64: 32, 32>}, {pipeline_mode = #tpu.pipeline_mode<synchronous>, transform_indices = @transform_5, window_bounds = array<i64: 32, 32>}, {pipeline_mode = #tpu.pipeline_mode<synchronous>, transform_indices = @transform_6, window_bounds = array<i64: 32, 32>}, {pipeline_mode = #tpu.pipeline_mode<synchronous>, transform_indices = @transform_7, window_bounds = array<i64: 32, 1>}, {pipeline_mode = #tpu.pipeline_mode<synchronous>, transform_indices = @transform_8, window_bounds = array<i64: 32, 1>}, {pipeline_mode = #tpu.pipeline_mode<synchronous>, transform_indices = @transform_9, window_bounds = array<i64: 32, 1>}, {transform_indices = @transform_10, window_bounds = array<i64: 1, 32, 128>}, {transform_indices = @transform_11, window_bounds = array<i64: 1, 32, 128>}, {transform_indices = @transform_12, window_bounds = array<i64: 1, 32, 128>}]} {
    %c0 = arith.constant 0 : index
    %c0_0 = arith.constant 0 : index
    %c0_1 = arith.constant 0 : index
    %0 = vector.load %arg1[%c0, %c0_0, %c0_1] : memref<1x32x128xf32, #tpu.memory_space<vmem>>, vector<1x32x128xf32>
    %1 = vector.shape_cast %0 : vector<1x32x128xf32> to vector<32x128xf32>
    %c0_2 = arith.constant 0 : index
    %c0_3 = arith.constant 0 : index
    %2 = vector.load %arg2[%c0_2, %c0_3] : memref<16x32xf32, #tpu.memory_space<vmem>>, vector<16x32xf32>
    %c0_4 = arith.constant 0 : index
    %c0_5 = arith.constant 0 : index
    %3 = vector.load %arg3[%c0_4, %c0_5] : memref<32x16xf32, #tpu.memory_space<vmem>>, vector<32x16xf32>
    %cst = arith.constant dense<0.000000e+00> : vector<16x128xf32>
    %4 = tpu.matmul %2, %1, %cst {dimension_numbers = #tpu.dot_dimension_numbers<[1], [0], [0], [1], [0, 0, 1, 1], [], []>} : vector<16x32xf32>, vector<32x128xf32>, vector<16x128xf32> -> vector<16x128xf32>
    %cst_6 = arith.constant dense<0.000000e+00> : vector<16xf32>
    %5 = vector.multi_reduction <add>, %4, %cst_6 [1] : vector<16x128xf32> to vector<16xf32>
    %6 = vector.shape_cast %5 : vector<16xf32> to vector<16x1xf32>
    %cst_7 = arith.constant 7.812500e-03 : f32
    %7 = vector.broadcast %cst_7 : f32 to vector<16x1xf32>
    %8 = arith.mulf %6, %7 : vector<16x1xf32>
    %cst_8 = arith.constant dense<0.000000e+00> : vector<32x1xf32>
    %9 = tpu.matmul %3, %8, %cst_8 {dimension_numbers = #tpu.dot_dimension_numbers<[1], [0], [0], [1], [0, 0, 1, 1], [], []>} : vector<32x16xf32>, vector<16x1xf32>, vector<32x1xf32> -> vector<32x1xf32>
    %10 = vector.broadcast %9 : vector<32x1xf32> to vector<32x128xf32>
    %11 = arith.subf %1, %10 : vector<32x128xf32>
    %12 = tpu.iota {dimensions = array<i32: 1>} : vector<32x128xi32>
    %c64_i32 = arith.constant 64 : i32
    %13 = vector.broadcast %c64_i32 : i32 to vector<32x128xi32>
    %14 = arith.cmpi slt, %12, %13 : vector<32x128xi32>
    %cst_9 = arith.constant 0.000000e+00 : f32
    %15 = vector.broadcast %cst_9 : f32 to vector<32x128xf32>
    %16 = arith.select %14, %11, %15 : vector<32x128xi1>, vector<32x128xf32>
    %17 = arith.mulf %16, %16 : vector<32x128xf32>
    %cst_10 = arith.constant dense<0.000000e+00> : vector<16x128xf32>
    %18 = tpu.matmul %2, %17, %cst_10 {dimension_numbers = #tpu.dot_dimension_numbers<[1], [0], [0], [1], [0, 0, 1, 1], [], []>} : vector<16x32xf32>, vector<32x128xf32>, vector<16x128xf32> -> vector<16x128xf32>
    %cst_11 = arith.constant dense<0.000000e+00> : vector<16xf32>
    %19 = vector.multi_reduction <add>, %18, %cst_11 [1] : vector<16x128xf32> to vector<16xf32>
    %20 = vector.shape_cast %19 : vector<16xf32> to vector<16x1xf32>
    %cst_12 = arith.constant 7.812500e-03 : f32
    %21 = vector.broadcast %cst_12 : f32 to vector<16x1xf32>
    %22 = arith.mulf %20, %21 : vector<16x1xf32>
    %cst_13 = arith.constant 9.99999974E-6 : f32
    %23 = vector.broadcast %cst_13 : f32 to vector<16x1xf32>
    %24 = arith.addf %22, %23 : vector<16x1xf32>
    %25 = math.rsqrt %24 : vector<16x1xf32>
    %cst_14 = arith.constant dense<0.000000e+00> : vector<32x1xf32>
    %26 = tpu.matmul %3, %25, %cst_14 {dimension_numbers = #tpu.dot_dimension_numbers<[1], [0], [0], [1], [0, 0, 1, 1], [], []>} : vector<32x16xf32>, vector<16x1xf32>, vector<32x1xf32> -> vector<32x1xf32>
    %c0_15 = arith.constant 0 : index
    %c0_16 = arith.constant 0 : index
    %27 = vector.load %arg4[%c0_15, %c0_16] : memref<32x2xf32, #tpu.memory_space<vmem>>, vector<32x1xf32>
    %c0_17 = arith.constant 0 : index
    %c1 = arith.constant 1 : index
    %28 = vector.load %arg4[%c0_17, %c1] : memref<32x2xf32, #tpu.memory_space<vmem>>, vector<32x1xf32>
    %29 = arith.mulf %26, %27 : vector<32x1xf32>
    %30 = vector.broadcast %29 : vector<32x1xf32> to vector<32x128xf32>
    %31 = arith.mulf %16, %30 : vector<32x128xf32>
    %32 = vector.broadcast %28 : vector<32x1xf32> to vector<32x128xf32>
    %33 = arith.addf %31, %32 : vector<32x128xf32>
    %34 = arith.truncf %33 : vector<32x128xf32> to vector<32x128xbf16>
    %c0_18 = arith.constant 0 : index
    %c0_19 = arith.constant 0 : index
    %35 = vector.load %arg5[%c0_18, %c0_19] : memref<32x32xbf16, #tpu.memory_space<vmem>>, vector<32x32xbf16>
    %cst_20 = arith.constant dense<0.000000e+00> : vector<32x128xf32>
    %36 = tpu.matmul %35, %34, %cst_20 {dimension_numbers = #tpu.dot_dimension_numbers<[1], [0], [0], [1], [0, 0, 1, 1], [], []>} : vector<32x32xbf16>, vector<32x128xbf16>, vector<32x128xf32> -> vector<32x128xf32>
    %c0_21 = arith.constant 0 : index
    %c0_22 = arith.constant 0 : index
    %37 = vector.load %arg8[%c0_21, %c0_22] : memref<32x1xf32, #tpu.memory_space<vmem>>, vector<32x1xf32>
    %38 = vector.broadcast %37 : vector<32x1xf32> to vector<32x128xf32>
    %39 = arith.addf %36, %38 : vector<32x128xf32>
    %40 = arith.truncf %39 : vector<32x128xf32> to vector<32x128xbf16>
    %c0_23 = arith.constant 0 : index
    %c0_24 = arith.constant 0 : index
    %c0_25 = arith.constant 0 : index
    %41 = vector.load %arg11[%c0_23, %c0_24, %c0_25] : memref<1x32x128xbf16, #tpu.memory_space<vmem>>, vector<1x32x128xbf16>
    %42 = vector.shape_cast %41 : vector<1x32x128xbf16> to vector<32x128xbf16>
    %43 = vector.shape_cast %40 : vector<32x128xbf16> to vector<1x32x128xbf16>
    tpu.vector_store %arg11[%c0_23, %c0_24, %c0_25], %43 {strides = array<i32>} : memref<1x32x128xbf16, #tpu.memory_space<vmem>>, vector<1x32x128xbf16>,
    %c0_26 = arith.constant 0 : index
    %c0_27 = arith.constant 0 : index
    %44 = vector.load %arg6[%c0_26, %c0_27] : memref<32x32xbf16, #tpu.memory_space<vmem>>, vector<32x32xbf16>
    %cst_28 = arith.constant dense<0.000000e+00> : vector<32x128xf32>
    %45 = tpu.matmul %44, %34, %cst_28 {dimension_numbers = #tpu.dot_dimension_numbers<[1], [0], [0], [1], [0, 0, 1, 1], [], []>} : vector<32x32xbf16>, vector<32x128xbf16>, vector<32x128xf32> -> vector<32x128xf32>
    %c0_29 = arith.constant 0 : index
    %c0_30 = arith.constant 0 : index
    %46 = vector.load %arg9[%c0_29, %c0_30] : memref<32x1xf32, #tpu.memory_space<vmem>>, vector<32x1xf32>
    %47 = vector.broadcast %46 : vector<32x1xf32> to vector<32x128xf32>
    %48 = arith.addf %45, %47 : vector<32x128xf32>
    %49 = arith.truncf %48 : vector<32x128xf32> to vector<32x128xbf16>
    %c0_31 = arith.constant 0 : index
    %c0_32 = arith.constant 0 : index
    %c0_33 = arith.constant 0 : index
    %50 = vector.load %arg12[%c0_31, %c0_32, %c0_33] : memref<1x32x128xbf16, #tpu.memory_space<vmem>>, vector<1x32x128xbf16>
    %51 = vector.shape_cast %50 : vector<1x32x128xbf16> to vector<32x128xbf16>
    %52 = vector.shape_cast %49 : vector<32x128xbf16> to vector<1x32x128xbf16>
    tpu.vector_store %arg12[%c0_31, %c0_32, %c0_33], %52 {strides = array<i32>} : memref<1x32x128xbf16, #tpu.memory_space<vmem>>, vector<1x32x128xbf16>,
    %c0_34 = arith.constant 0 : index
    %c0_35 = arith.constant 0 : index
    %53 = vector.load %arg7[%c0_34, %c0_35] : memref<32x32xbf16, #tpu.memory_space<vmem>>, vector<32x32xbf16>
    %cst_36 = arith.constant dense<0.000000e+00> : vector<32x128xf32>
    %54 = tpu.matmul %53, %34, %cst_36 {dimension_numbers = #tpu.dot_dimension_numbers<[1], [0], [0], [1], [0, 0, 1, 1], [], []>} : vector<32x32xbf16>, vector<32x128xbf16>, vector<32x128xf32> -> vector<32x128xf32>
    %c0_37 = arith.constant 0 : index
    %c0_38 = arith.constant 0 : index
    %55 = vector.load %arg10[%c0_37, %c0_38] : memref<32x1xf32, #tpu.memory_space<vmem>>, vector<32x1xf32>
    %56 = vector.broadcast %55 : vector<32x1xf32> to vector<32x128xf32>
    %57 = arith.addf %54, %56 : vector<32x128xf32>
    %58 = arith.truncf %57 : vector<32x128xf32> to vector<32x128xbf16>
    %c0_39 = arith.constant 0 : index
    %c0_40 = arith.constant 0 : index
    %c0_41 = arith.constant 0 : index
    %59 = vector.load %arg13[%c0_39, %c0_40, %c0_41] : memref<1x32x128xbf16, #tpu.memory_space<vmem>>, vector<1x32x128xbf16>
    %60 = vector.shape_cast %59 : vector<1x32x128xbf16> to vector<32x128xbf16>
    %61 = vector.shape_cast %58 : vector<32x128xbf16> to vector<1x32x128xbf16>
    tpu.vector_store %arg13[%c0_39, %c0_40, %c0_41], %61 {strides = array<i32>} : memref<1x32x128xbf16, #tpu.memory_space<vmem>>, vector<1x32x128xbf16>,
    return
  }
  func.func @transform_0(%arg0: i32) -> (i32, i32, i32) {
    %c0_i32 = arith.constant 0 : i32
    %c0_i32_0 = arith.constant 0 : i32
    %c0_i32_1 = arith.constant 0 : i32
    return %arg0, %c0_i32, %c0_i32_0 : i32, i32, i32
  }
  func.func @transform_1(%arg0: i32) -> (i32, i32) {
    %c0_i32 = arith.constant 0 : i32
    %c0_i32_0 = arith.constant 0 : i32
    %c0_i32_1 = arith.constant 0 : i32
    return %c0_i32, %c0_i32_0 : i32, i32
  }
  func.func @transform_2(%arg0: i32) -> (i32, i32) {
    %c0_i32 = arith.constant 0 : i32
    %c0_i32_0 = arith.constant 0 : i32
    %c0_i32_1 = arith.constant 0 : i32
    return %c0_i32, %c0_i32_0 : i32, i32
  }
  func.func @transform_3(%arg0: i32) -> (i32, i32) {
    %c0_i32 = arith.constant 0 : i32
    %c0_i32_0 = arith.constant 0 : i32
    %c0_i32_1 = arith.constant 0 : i32
    return %c0_i32, %c0_i32_0 : i32, i32
  }
  func.func @transform_4(%arg0: i32) -> (i32, i32) {
    %c0_i32 = arith.constant 0 : i32
    %c0_i32_0 = arith.constant 0 : i32
    %c0_i32_1 = arith.constant 0 : i32
    return %c0_i32, %c0_i32_0 : i32, i32
  }
  func.func @transform_5(%arg0: i32) -> (i32, i32) {
    %c0_i32 = arith.constant 0 : i32
    %c0_i32_0 = arith.constant 0 : i32
    %c0_i32_1 = arith.constant 0 : i32
    return %c0_i32, %c0_i32_0 : i32, i32
  }
  func.func @transform_6(%arg0: i32) -> (i32, i32) {
    %c0_i32 = arith.constant 0 : i32
    %c0_i32_0 = arith.constant 0 : i32
    %c0_i32_1 = arith.constant 0 : i32
    return %c0_i32, %c0_i32_0 : i32, i32
  }
  func.func @transform_7(%arg0: i32) -> (i32, i32) {
    %c0_i32 = arith.constant 0 : i32
    %c0_i32_0 = arith.constant 0 : i32
    %c0_i32_1 = arith.constant 0 : i32
    return %c0_i32, %c0_i32_0 : i32, i32
  }
  func.func @transform_8(%arg0: i32) -> (i32, i32) {
    %c0_i32 = arith.constant 0 : i32
    %c0_i32_0 = arith.constant 0 : i32
    %c0_i32_1 = arith.constant 0 : i32
    return %c0_i32, %c0_i32_0 : i32, i32
  }
  func.func @transform_9(%arg0: i32) -> (i32, i32) {
    %c0_i32 = arith.constant 0 : i32
    %c0_i32_0 = arith.constant 0 : i32
    %c0_i32_1 = arith.constant 0 : i32
    return %c0_i32, %c0_i32_0 : i32, i32
  }
  func.func @transform_10(%arg0: i32) -> (i32, i32, i32) {
    %c0_i32 = arith.constant 0 : i32
    %c0_i32_0 = arith.constant 0 : i32
    %c0_i32_1 = arith.constant 0 : i32
    return %arg0, %c0_i32, %c0_i32_0 : i32, i32, i32
  }
  func.func @transform_11(%arg0: i32) -> (i32, i32, i32) {
    %c0_i32 = arith.constant 0 : i32
    %c0_i32_0 = arith.constant 0 : i32
    %c0_i32_1 = arith.constant 0 : i32
    return %arg0, %c0_i32, %c0_i32_0 : i32, i32, i32
  }
  func.func @transform_12(%arg0: i32) -> (i32, i32, i32) {
    %c0_i32 = arith.constant 0 : i32
    %c0_i32_0 = arith.constant 0 : i32
    %c0_i32_1 = arith.constant 0 : i32
    return %arg0, %c0_i32, %c0_i32_0 : i32, i32, i32
  }
}

</mosaic_0001>

<llo_original>
// kernel: tpu_custom_call.1
$region0: #{tpu_custom_call.1}
  #allocation0 [shape = 'u32[]', space=smem, size = 0x4, offset = 0x4, fixed_abs, tag = 'smem constant byte address 0x4 - core index']
  #allocation1 [shape = 'u32[144,128]{1,0:T(1,128)}', space=vmem, size = 0x12000, scoped, tag = 'internal scratch']
  %s0 = inlined_call_operand.vmem [shape: f32[2,32,128], index: 0, kind: input, shape index: {}]
  %s1 = inlined_call_operand.vmem [shape: f32[16,32], index: 1, kind: input, shape index: {}]
  %s2 = inlined_call_operand.vmem [shape: f32[32,16], index: 2, kind: input, shape index: {}]
  %s3 = inlined_call_operand.vmem [shape: f32[32,2], index: 3, kind: input, shape index: {}]
  %s4 = inlined_call_operand.vmem [shape: bf16[32,32], index: 4, kind: input, shape index: {}]
  %s5 = inlined_call_operand.vmem [shape: bf16[32,32], index: 5, kind: input, shape index: {}]
  %s6 = inlined_call_operand.vmem [shape: bf16[32,32], index: 6, kind: input, shape index: {}]
  %s7 = inlined_call_operand.vmem [shape: f32[32,1], index: 7, kind: input, shape index: {}]
  %s8 = inlined_call_operand.vmem [shape: f32[32,1], index: 8, kind: input, shape index: {}]
  %s9 = inlined_call_operand.vmem [shape: f32[32,1], index: 9, kind: input, shape index: {}]
  %s10 = inlined_call_operand.hbm [shape: bf16[2,32,128], index: 10, kind: output, shape index: {0}]
  %s11 = inlined_call_operand.hbm [shape: bf16[2,32,128], index: 11, kind: output, shape index: {1}]
  %s12 = inlined_call_operand.hbm [shape: bf16[2,32,128], index: 12, kind: output, shape index: {2}]
  %13 = xla_tuple %s10, %s11, %s12
  %s14 = sld [smem:[#allocation0]]
  $region89: #{tpu_custom_call.1} parent=0
    _
  %s16 = ssub.s32 1, %s14
  %s17 = scalar_select 0, %s16, %s14
  $region1: #{tpu_custom_call.1} parent=0
    #allocation2 [shape = 'u8[16384]{0}', space=vmem, size = 0x4000, scoped, tag = 'output window, operand 0']
    #allocation3 [shape = 's32[2]{0}', space=sflag, size = 0x8, scoped, tag = 'scoped memory for tpu_custom_call.1']
    #allocation4 [shape = 'u8[16384]{0}', space=vmem, size = 0x4000, scoped, tag = 'output window, operand 1']
    #allocation5 [shape = 's32[2]{0}', space=sflag, size = 0x8, scoped, tag = 'scoped memory for tpu_custom_call.1']
    #allocation6 [shape = 'u8[16384]{0}', space=vmem, size = 0x4000, scoped, tag = 'output window, operand 2']
    %18 = vsyncpa [#allocation3], 0
    %s19 = scalar_lea.sflag [#allocation3], 1
    %20 = vsyncpa %s19, 0
    %21 = vsyncpa [#allocation5], 0
    %s22 = scalar_lea.sflag [#allocation5], 1
    %23 = vsyncpa %s22, 0
    loop: start=0, step=1, limit=4
    $region2: #{tpu_custom_call.1} parent=1 // loop_pre_header
      _
    $region3: #{tpu_custom_call.1} parent=1 // loop_header
      %s25 = sphi 0, %s29
      %p26 = scmp.ge.s32.totalorder %s25, 4
      %s35 = sphi 0, %s37
      %s38 = sphi 0, %s35
      %s39 = sphi 0, %s38
      %s55 = sphi 0, %s39
      %s59 = sphi 0, %s59
      %s61 = sphi 0, %s59
      %s62 = sphi 0, %s61
      %s76 = sphi 0, %s62
      %s80 = sphi 0, %s80
      %s82 = sphi 0, %s80
      %s83 = sphi 0, %s82
      %s97 = sphi 0, %s83
      %s101 = sphi 0, %s101
      %s103 = sphi 0, %s101
      %s104 = sphi 0, %s103
      %s118 = sphi 0, %s104
      %s122 = sphi 0, %s122
      %s124 = sphi 0, %s122
      %s125 = sphi 0, %s124
      %s139 = sphi 0, %s125
      %s143 = sphi 0, %s143
      %s145 = sphi 0, %s143
      %s146 = sphi 0, %s145
      %s160 = sphi 0, %s146
      %s164 = sphi 0, %s164
      %s166 = sphi 0, %s164
      %s167 = sphi 0, %s166
      %s181 = sphi 0, %s167
      %s185 = sphi 0, %s185
      %s187 = sphi 0, %s185
      %s188 = sphi 0, %s187
      %s202 = sphi 0, %s188
      %s206 = sphi 0, %s206
      %s208 = sphi 0, %s206
      %s209 = sphi 0, %s208
      %s223 = sphi 0, %s209
      %s227 = sphi 0, %s227
      %s229 = sphi 0, %s227
      %s230 = sphi 0, %s229
      %s244 = sphi 0, %s230
      %s250 = sphi 0, %s252
      %s253 = sphi 0, %s250
      %s254 = sphi 0, %s253
      %s270 = sphi 0, %s254
      %s276 = sphi 0, %s278
      %s279 = sphi 0, %s276
      %s280 = sphi 0, %s279
      %s296 = sphi 0, %s280
      %s302 = sphi 0, %s304
      %s305 = sphi 0, %s302
      %s306 = sphi 0, %s305
      %s322 = sphi 0, %s306
    $region4: #{tpu_custom_call.1} parent=1 // loop_header_branch
      %28 = sbr.rel (%p26) target = $region8
    $region5: #{tpu_custom_call.1} parent=1 // loop_body
      %s30 = ssub.s32 %s25, 1
      %s31 = ssub.s32 %s25, 2
      %s32 = sadd.s32 %s25, 1
      %s33 = ssub.s32 %s25, %s32
      %p34 = scmp.eq.s32.totalorder %s33, 0
      %s36 = sadd.s32 %s35, 1
      %s37 = scalar_select %p34, %s35, %s36
      %p40 = pneg %p34
      %p41 = scmp.eq.s32.totalorder %s25, 1
      %p42 = por %p40, %p41
      %p43 = scmp.ne.s32.totalorder %s35, %s38
      %p44 = scmp.eq.s32.totalorder %s25, 0
      %p45 = por %p43, %p44
      %p46 = scmp.ne.s32.totalorder %s35, %s38
      %p47 = scmp.eq.s32.totalorder %s30, 1
      %p48 = por %p46, %p47
      %p49 = scmp.ne.s32.totalorder %s38, %s39
      %p50 = scmp.eq.s32.totalorder %s30, 0
      %p51 = por %p49, %p50
      %p52 = scmp.ne.s32.totalorder %s38, %s39
      %p53 = scmp.eq.s32.totalorder %s31, 1
      %p54 = por %p52, %p53
      %p56 = scmp.ne.s32.totalorder %s39, %s55
      %p57 = scmp.eq.s32.totalorder %s31, 0
      %p58 = por %p56, %p57
      %s60 = sadd.s32 %s59, 1
      %p63 = scmp.eq.s32.totalorder %s25, 1
      %p64 = scmp.ne.s32.totalorder %s59, %s61
      %p65 = scmp.eq.s32.totalorder %s25, 0
      %p66 = por %p64, %p65
      %p67 = scmp.ne.s32.totalorder %s59, %s61
      %p68 = scmp.eq.s32.totalorder %s30, 1
      %p69 = por %p67, %p68
      %p70 = scmp.ne.s32.totalorder %s61, %s62
      %p71 = scmp.eq.s32.totalorder %s30, 0
      %p72 = por %p70, %p71
      %p73 = scmp.ne.s32.totalorder %s61, %s62
      %p74 = scmp.eq.s32.totalorder %s31, 1
      %p75 = por %p73, %p74
      %p77 = scmp.ne.s32.totalorder %s62, %s76
      %p78 = scmp.eq.s32.totalorder %s31, 0
      %p79 = por %p77, %p78
      %s81 = sadd.s32 %s80, 1
      %p84 = scmp.eq.s32.totalorder %s25, 1
      %p85 = scmp.ne.s32.totalorder %s80, %s82
      %p86 = scmp.eq.s32.totalorder %s25, 0
      %p87 = por %p85, %p86
      %p88 = scmp.ne.s32.totalorder %s80, %s82
      %p89 = scmp.eq.s32.totalorder %s30, 1
      %p90 = por %p88, %p89
      %p91 = scmp.ne.s32.totalorder %s82, %s83
      %p92 = scmp.eq.s32.totalorder %s30, 0
      %p93 = por %p91, %p92
      %p94 = scmp.ne.s32.totalorder %s82, %s83
      %p95 = scmp.eq.s32.totalorder %s31, 1
      %p96 = por %p94, %p95
      %p98 = scmp.ne.s32.totalorder %s83, %s97
      %p99 = scmp.eq.s32.totalorder %s31, 0
      %p100 = por %p98, %p99
      %s102 = sadd.s32 %s101, 1
      %p105 = scmp.eq.s32.totalorder %s25, 1
      %p106 = scmp.ne.s32.totalorder %s101, %s103
      %p107 = scmp.eq.s32.totalorder %s25, 0
      %p108 = por %p106, %p107
      %p109 = scmp.ne.s32.totalorder %s101, %s103
      %p110 = scmp.eq.s32.totalorder %s30, 1
      %p111 = por %p109, %p110
      %p112 = scmp.ne.s32.totalorder %s103, %s104
      %p113 = scmp.eq.s32.totalorder %s30, 0
      %p114 = por %p112, %p113
      %p115 = scmp.ne.s32.totalorder %s103, %s104
      %p116 = scmp.eq.s32.totalorder %s31, 1
      %p117 = por %p115, %p116
      %p119 = scmp.ne.s32.totalorder %s104, %s118
      %p120 = scmp.eq.s32.totalorder %s31, 0
      %p121 = por %p119, %p120
      %s123 = sadd.s32 %s122, 1
      %p126 = scmp.eq.s32.totalorder %s25, 1
      %p127 = scmp.ne.s32.totalorder %s122, %s124
      %p128 = scmp.eq.s32.totalorder %s25, 0
      %p129 = por %p127, %p128
      %p130 = scmp.ne.s32.totalorder %s122, %s124
      %p131 = scmp.eq.s32.totalorder %s30, 1
      %p132 = por %p130, %p131
      %p133 = scmp.ne.s32.totalorder %s124, %s125
      %p134 = scmp.eq.s32.totalorder %s30, 0
      %p135 = por %p133, %p134
      %p136 = scmp.ne.s32.totalorder %s124, %s125
      %p137 = scmp.eq.s32.totalorder %s31, 1
      %p138 = por %p136, %p137
      %p140 = scmp.ne.s32.totalorder %s125, %s139
      %p141 = scmp.eq.s32.totalorder %s31, 0
      %p142 = por %p140, %p141
      %s144 = sadd.s32 %s143, 1
      %p147 = scmp.eq.s32.totalorder %s25, 1
      %p148 = scmp.ne.s32.totalorder %s143, %s145
      %p149 = scmp.eq.s32.totalorder %s25, 0
      %p150 = por %p148, %p149
      %p151 = scmp.ne.s32.totalorder %s143, %s145
      %p152 = scmp.eq.s32.totalorder %s30, 1
      %p153 = por %p151, %p152
      %p154 = scmp.ne.s32.totalorder %s145, %s146
      %p155 = scmp.eq.s32.totalorder %s30, 0
      %p156 = por %p154, %p155
      %p157 = scmp.ne.s32.totalorder %s145, %s146
      %p158 = scmp.eq.s32.totalorder %s31, 1
      %p159 = por %p157, %p158
      %p161 = scmp.ne.s32.totalorder %s146, %s160
      %p162 = scmp.eq.s32.totalorder %s31, 0
      %p163 = por %p161, %p162
      %s165 = sadd.s32 %s164, 1
      %p168 = scmp.eq.s32.totalorder %s25, 1
      %p169 = scmp.ne.s32.totalorder %s164, %s166
      %p170 = scmp.eq.s32.totalorder %s25, 0
      %p171 = por %p169, %p170
      %p172 = scmp.ne.s32.totalorder %s164, %s166
      %p173 = scmp.eq.s32.totalorder %s30, 1
      %p174 = por %p172, %p173
      %p175 = scmp.ne.s32.totalorder %s166, %s167
      %p176 = scmp.eq.s32.totalorder %s30, 0
      %p177 = por %p175, %p176
      %p178 = scmp.ne.s32.totalorder %s166, %s167
      %p179 = scmp.eq.s32.totalorder %s31, 1
      %p180 = por %p178, %p179
      %p182 = scmp.ne.s32.totalorder %s167, %s181
      %p183 = scmp.eq.s32.totalorder %s31, 0
      %p184 = por %p182, %p183
      %s186 = sadd.s32 %s185, 1
      %p189 = scmp.eq.s32.totalorder %s25, 1
      %p190 = scmp.ne.s32.totalorder %s185, %s187
      %p191 = scmp.eq.s32.totalorder %s25, 0
      %p192 = por %p190, %p191
      %p193 = scmp.ne.s32.totalorder %s185, %s187
      %p194 = scmp.eq.s32.totalorder %s30, 1
      %p195 = por %p193, %p194
      %p196 = scmp.ne.s32.totalorder %s187, %s188
      %p197 = scmp.eq.s32.totalorder %s30, 0
      %p198 = por %p196, %p197
      %p199 = scmp.ne.s32.totalorder %s187, %s188
      %p200 = scmp.eq.s32.totalorder %s31, 1
      %p201 = por %p199, %p200
      %p203 = scmp.ne.s32.totalorder %s188, %s202
      %p204 = scmp.eq.s32.totalorder %s31, 0
      %p205 = por %p203, %p204
      %s207 = sadd.s32 %s206, 1
      %p210 = scmp.eq.s32.totalorder %s25, 1
      %p211 = scmp.ne.s32.totalorder %s206, %s208
      %p212 = scmp.eq.s32.totalorder %s25, 0
      %p213 = por %p211, %p212
      %p214 = scmp.ne.s32.totalorder %s206, %s208
      %p215 = scmp.eq.s32.totalorder %s30, 1
      %p216 = por %p214, %p215
      %p217 = scmp.ne.s32.totalorder %s208, %s209
      %p218 = scmp.eq.s32.totalorder %s30, 0
      %p219 = por %p217, %p218
      %p220 = scmp.ne.s32.totalorder %s208, %s209
      %p221 = scmp.eq.s32.totalorder %s31, 1
      %p222 = por %p220, %p221
      %p224 = scmp.ne.s32.totalorder %s209, %s223
      %p225 = scmp.eq.s32.totalorder %s31, 0
      %p226 = por %p224, %p225
      %s228 = sadd.s32 %s227, 1
      %p231 = scmp.eq.s32.totalorder %s25, 1
      %p232 = scmp.ne.s32.totalorder %s227, %s229
      %p233 = scmp.eq.s32.totalorder %s25, 0
      %p234 = por %p232, %p233
      %p235 = scmp.ne.s32.totalorder %s227, %s229
      %p236 = scmp.eq.s32.totalorder %s30, 1
      %p237 = por %p235, %p236
      %p238 = scmp.ne.s32.totalorder %s229, %s230
      %p239 = scmp.eq.s32.totalorder %s30, 0
      %p240 = por %p238, %p239
      %p241 = scmp.ne.s32.totalorder %s229, %s230
      %p242 = scmp.eq.s32.totalorder %s31, 1
      %p243 = por %p241, %p242
      %p245 = scmp.ne.s32.totalorder %s230, %s244
      %p246 = scmp.eq.s32.totalorder %s31, 0
      %p247 = por %p245, %p246
      %s248 = ssub.s32 %s25, %s32
      %p249 = scmp.eq.s32.totalorder %s248, 0
      %s251 = sadd.s32 %s250, 1
      %s252 = scalar_select %p249, %s250, %s251
      %p255 = pneg %p249
      %p256 = scmp.eq.s32.totalorder %s25, 1
      %p257 = por %p255, %p256
      %p258 = scmp.ne.s32.totalorder %s250, %s253
      %p259 = scmp.eq.s32.totalorder %s25, 0
      %p260 = por %p258, %p259
      %p261 = scmp.ne.s32.totalorder %s250, %s253
      %p262 = scmp.eq.s32.totalorder %s30, 1
      %p263 = por %p261, %p262
      %p264 = scmp.ne.s32.totalorder %s253, %s254
      %p265 = scmp.eq.s32.totalorder %s30, 0
      %p266 = por %p264, %p265
      %p267 = scmp.ne.s32.totalorder %s253, %s254
      %p268 = scmp.eq.s32.totalorder %s31, 1
      %p269 = por %p267, %p268
      %p271 = scmp.ne.s32.totalorder %s254, %s270
      %p272 = scmp.eq.s32.totalorder %s31, 0
      %p273 = por %p271, %p272
      %s274 = ssub.s32 %s25, %s32
      %p275 = scmp.eq.s32.totalorder %s274, 0
      %s277 = sadd.s32 %s276, 1
      %s278 = scalar_select %p275, %s276, %s277
      %p281 = pneg %p275
      %p282 = scmp.eq.s32.totalorder %s25, 1
      %p283 = por %p281, %p282
      %p284 = scmp.ne.s32.totalorder %s276, %s279
      %p285 = scmp.eq.s32.totalorder %s25, 0
      %p286 = por %p284, %p285
      %p287 = scmp.ne.s32.totalorder %s276, %s279
      %p288 = scmp.eq.s32.totalorder %s30, 1
      %p289 = por %p287, %p288
      %p290 = scmp.ne.s32.totalorder %s279, %s280
      %p291 = scmp.eq.s32.totalorder %s30, 0
      %p292 = por %p290, %p291
      %p293 = scmp.ne.s32.totalorder %s279, %s280
      %p294 = scmp.eq.s32.totalorder %s31, 1
      %p295 = por %p293, %p294
      %p297 = scmp.ne.s32.totalorder %s280, %s296
      %p298 = scmp.eq.s32.totalorder %s31, 0
      %p299 = por %p297, %p298
      %s300 = ssub.s32 %s25, %s32
      %p301 = scmp.eq.s32.totalorder %s300, 0
      %s303 = sadd.s32 %s302, 1
      %s304 = scalar_select %p301, %s302, %s303
      %p307 = pneg %p301
      %p308 = scmp.eq.s32.totalorder %s25, 1
      %p309 = por %p307, %p308
      %p310 = scmp.ne.s32.totalorder %s302, %s305
      %p311 = scmp.eq.s32.totalorder %s25, 0
      %p312 = por %p310, %p311
      %p313 = scmp.ne.s32.totalorder %s302, %s305
      %p314 = scmp.eq.s32.totalorder %s30, 1
      %p315 = por %p313, %p314
      %p316 = scmp.ne.s32.totalorder %s305, %s306
      %p317 = scmp.eq.s32.totalorder %s30, 0
      %p318 = por %p316, %p317
      %p319 = scmp.ne.s32.totalorder %s305, %s306
      %p320 = scmp.eq.s32.totalorder %s31, 1
      %p321 = por %p319, %p320
      %p323 = scmp.ne.s32.totalorder %s306, %s322
      %p324 = scmp.eq.s32.totalorder %s31, 0
      %p325 = por %p323, %p324
      %p326 = scmp.le.s32.totalorder 1, %s25
      %p327 = scmp.lt.s32.totalorder %s25, 3
      %p328 = pnand %p326, %p327
      %p329 = pneg %p328
      // Predicated region
      $region9: #{tpu_custom_call.1} parent=5 // pred_check
        _
      $region10: #{tpu_custom_call.1} parent=5 // pred_check_branch
        %331 = sbr.rel (%p328) target = $region12
      $region11: #{tpu_custom_call.1} parent=5 // pred_region
        %s332 = ssub.s32 %s25, 1
        // Predicated region
        $region13: #{tpu_custom_call.1} parent=11 // pred_check
          %p333 = pneg %p72
        $region14: #{tpu_custom_call.1} parent=11 // pred_check_branch
          %335 = sbr.rel (%p333) target = $region16
        $region15: #{tpu_custom_call.1} parent=11 // pred_region
          _
        $region16: #{tpu_custom_call.1} parent=11 // pred_fallthru
          _
        // Predicated region
        $region17: #{tpu_custom_call.1} parent=11 // pred_check
          %p336 = pneg %p93
        $region18: #{tpu_custom_call.1} parent=11 // pred_check_branch
          %338 = sbr.rel (%p336) target = $region20
        $region19: #{tpu_custom_call.1} parent=11 // pred_region
          _
        $region20: #{tpu_custom_call.1} parent=11 // pred_fallthru
          _
        // Predicated region
        $region21: #{tpu_custom_call.1} parent=11 // pred_check
          %p339 = pneg %p114
        $region22: #{tpu_custom_call.1} parent=11 // pred_check_branch
          %341 = sbr.rel (%p339) target = $region24
        $region23: #{tpu_custom_call.1} parent=11 // pred_region
          _
        $region24: #{tpu_custom_call.1} parent=11 // pred_fallthru
          _
        // Predicated region
        $region25: #{tpu_custom_call.1} parent=11 // pred_check
          %p342 = pneg %p135
        $region26: #{tpu_custom_call.1} parent=11 // pred_check_branch
          %344 = sbr.rel (%p342) target = $region28
        $region27: #{tpu_custom_call.1} parent=11 // pred_region
          _
        $region28: #{tpu_custom_call.1} parent=11 // pred_fallthru
          _
        // Predicated region
        $region29: #{tpu_custom_call.1} parent=11 // pred_check
          %p345 = pneg %p156
        $region30: #{tpu_custom_call.1} parent=11 // pred_check_branch
          %347 = sbr.rel (%p345) target = $region32
        $region31: #{tpu_custom_call.1} parent=11 // pred_region
          _
        $region32: #{tpu_custom_call.1} parent=11 // pred_fallthru
          _
        // Predicated region
        $region33: #{tpu_custom_call.1} parent=11 // pred_check
          %p348 = pneg %p177
        $region34: #{tpu_custom_call.1} parent=11 // pred_check_branch
          %350 = sbr.rel (%p348) target = $region36
        $region35: #{tpu_custom_call.1} parent=11 // pred_region
          _
        $region36: #{tpu_custom_call.1} parent=11 // pred_fallthru
          _
        // Predicated region
        $region37: #{tpu_custom_call.1} parent=11 // pred_check
          %p351 = pneg %p198
        $region38: #{tpu_custom_call.1} parent=11 // pred_check_branch
          %353 = sbr.rel (%p351) target = $region40
        $region39: #{tpu_custom_call.1} parent=11 // pred_region
          _
        $region40: #{tpu_custom_call.1} parent=11 // pred_fallthru
          _
        // Predicated region
        $region41: #{tpu_custom_call.1} parent=11 // pred_check
          %p354 = pneg %p219
        $region42: #{tpu_custom_call.1} parent=11 // pred_check_branch
          %356 = sbr.rel (%p354) target = $region44
        $region43: #{tpu_custom_call.1} parent=11 // pred_region
          _
        $region44: #{tpu_custom_call.1} parent=11 // pred_fallthru
          _
        // Predicated region
        $region45: #{tpu_custom_call.1} parent=11 // pred_check
          %p357 = pneg %p240
        $region46: #{tpu_custom_call.1} parent=11 // pred_check_branch
          %359 = sbr.rel (%p357) target = $region48
        $region47: #{tpu_custom_call.1} parent=11 // pred_region
          _
        $region48: #{tpu_custom_call.1} parent=11 // pred_fallthru
          _
      $region12: #{tpu_custom_call.1} parent=5 // pred_fallthru
        _
      %p360 = scmp.lt.s32.totalorder %s25, 2
      // Predicated region
      $region49: #{tpu_custom_call.1} parent=5 // pred_check
        %p361 = pneg %p360
      $region50: #{tpu_custom_call.1} parent=5 // pred_check_branch
        %363 = sbr.rel (%p361) target = $region52
      $region51: #{tpu_custom_call.1} parent=5 // pred_region
        // Predicated region
        $region53: #{tpu_custom_call.1} parent=51 // pred_check
          %p364 = pneg %p45
        $region54: #{tpu_custom_call.1} parent=51 // pred_check_branch
          %366 = sbr.rel (%p364) target = $region56
        $region55: #{tpu_custom_call.1} parent=51 // pred_region
          %p367 = scmp.lt.s32.totalorder %s25, 1
          %s368 = scalar_select %p367, %s25, 1
          %s369 = smul.addr %s368, 4
          %s370 = smul.addr %s369, 8
          %s371 = scalar_lea.vmem %s0, %s370
        $region56: #{tpu_custom_call.1} parent=51 // pred_fallthru
          _
      $region52: #{tpu_custom_call.1} parent=5 // pred_fallthru
        _
      %p372 = scmp.le.s32.totalorder 1, %s25
      %p373 = scmp.lt.s32.totalorder %s25, 3
      %p374 = pnand %p372, %p373
      %p375 = pneg %p374
      // Predicated region
      $region57: #{tpu_custom_call.1} parent=5 // pred_check
        _
      $region58: #{tpu_custom_call.1} parent=5 // pred_check_branch
        %377 = sbr.rel (%p374) target = $region60
      $region59: #{tpu_custom_call.1} parent=5 // pred_region
        %s378 = ssub.s32 %s25, 1
        %p379 = scmp.lt.s32.totalorder %s30, 1
        %s380 = scalar_select %p379, %s30, 1
        %s381 = smul.addr %s380, 4
        %s382 = smul.addr %s381, 8
        %s383 = scalar_lea.vmem %s0, %s382
        %p384 = pneg %p51
        %p385 = pneg %p48
        %p386 = pneg %p72
        %p387 = pneg %p69
        %p388 = pneg %p93
        %p389 = pneg %p90
        %p390 = pneg %p114
        %p391 = pneg %p111
        %p392 = pneg %p135
        %p393 = pneg %p132
        %p394 = pneg %p156
        %p395 = pneg %p153
        %p396 = pneg %p177
        %p397 = pneg %p174
        %p398 = pneg %p198
        %p399 = pneg %p195
        %p400 = pneg %p219
        %p401 = pneg %p216
        %p402 = pneg %p240
        %p403 = pneg %p237
        %p404 = pneg %p266
        %p405 = pneg %p263
        %s406 = sand.u32 %s253, 1
        %s407 = scalar_lea.sflag [#allocation3], %s406
        %s408 = sand.u32 %s253, 1
        %s409 = smul.addr %s408, 16
        %s410 = scalar_lea.vmem [#allocation2], %s409
        %p411 = pneg %p292
        %p412 = pneg %p289
        %s413 = sand.u32 %s30, 1
        %s414 = scalar_lea.sflag [#allocation5], %s413
        %s415 = sand.u32 %s279, 1
        %s416 = smul.addr %s415, 16
        %s417 = scalar_lea.vmem [#allocation4], %s416
        %p418 = pneg %p318
        %p419 = pneg %p315
        %s420 = sand.u32 %s30, 1
        %s421 = scalar_lea.sflag [#allocation5], %s420
        %s422 = sand.u32 %s305, 1
        %s423 = smul.addr %s422, 16
        %s424 = scalar_lea.vmem [#allocation6], %s423
        %p425 = scmp.lt.s32.totalorder %s30, 1
        %s426 = scalar_select %p425, %s30, 1
        %s427 = smul.addr %s426, 4
        %s428 = smul.addr %s427, 8
        %s429 = scalar_lea.vmem %s0, %s428
        %v431 = vld [vmem:[%s429] sm:$0xff]
        %v432 = vld [vmem:[%s429 + $0x8] sm:$0xff]
        %v433 = vld [vmem:[%s429 + $0x10] sm:$0xff]
        %v434 = vld [vmem:[%s429 + $0x18] sm:$0xff]
        %v435 = vld [vmem:[%s1] sm:$0xff]
        %v436 = vld [vmem:[%s1 + $0x8] sm:$0xff]
        %v437 = vld [vmem:[%s2] sm:$0xff]
        %v438 = vld [vmem:[%s2 + $0x8] sm:$0xff]
        %v439 = vld [vmem:[%s2 + $0x10] sm:$0xff]
        %v440 = vld [vmem:[%s2 + $0x18] sm:$0xff]
        %vm441 = vcmask 261120
        %v443 = vsel %vm441, %v435, 0
        %v446 = vsel %vm441, %v436, 0
        %448 = vmatprep.subr.mxu0 0.0
        %449 = vmatpush1.msra.mxu0 %v431
        %450 = vmatprep.subr.mxu0 0.0
        %451 = vmatpush1.msra.mxu0 %v432
        %452 = vmatprep.subr.mxu0 0.0
        %453 = vmatpush1.msra.mxu0 %v433
        %454 = vmatprep.subr.mxu0 0.0
        %455 = vmatpush1.msra.mxu0 %v434
        %456 = vmatprep.subr.mxu0 0.0
        %457 = vmatpush1.msra.mxu0 0.0
        %458 = vmatprep.subr.mxu0 0.0
        %459 = vmatpush1.msra.mxu0 0.0
        %460 = vmatprep.subr.mxu0 0.0
        %461 = vmatpush1.msra.mxu0 0.0
        %462 = vmatprep.subr.mxu0 0.0
        %463 = vmatpush1.msra.mxu0 0.0
        %464 = vmatprep.subr.mxu0 0.0
        %465 = vmatpush1.msra.mxu0 0.0
        %466 = vmatprep.subr.mxu0 0.0
        %467 = vmatpush1.msra.mxu0 0.0
        %468 = vmatprep.subr.mxu0 0.0
        %469 = vmatpush1.msra.mxu0 0.0
        %470 = vmatprep.subr.mxu0 0.0
        %471 = vmatpush1.msra.mxu0 0.0
        %472 = vmatprep.subr.mxu0 0.0
        %473 = vmatpush1.msra.mxu0 0.0
        %474 = vmatprep.subr.mxu0 0.0
        %475 = vmatpush1.msra.mxu0 0.0
        %476 = vmatprep.subr.mxu0 0.0
        %477 = vmatpush1.msra.mxu0 0.0
        %478 = vmatprep.subr.mxu0 0.0
        %479 = vmatpush1.msra.mxu0 0.0
        %480 = vmatprep.subr.mxu0 0.0
        %481 = vmatpush1.msra.mxu0 0.0
        %482 = vmatprep.subr.mxu0 0.0
        %483 = vmatpush1.msra.mxu0 0.0
        %484 = vmatprep.subr.mxu0 0.0
        %485 = vmatpush1.msra.mxu0 0.0
        %486 = vmatprep.subr.mxu0 0.0
        %487 = vmatpush1.msra.mxu0 0.0
        %488 = vmatprep.subr.mxu0 0.0
        %489 = vmatpush1.msra.mxu0 0.0
        %490 = vmatprep.subr.mxu0 0.0
        %491 = vmatpush1.msra.mxu0 0.0
        %492 = vmatprep.subr.mxu0 0.0
        %493 = vmatpush1.msra.mxu0 0.0
        %494 = vmatprep.subr.mxu0 0.0
        %495 = vmatpush1.msra.mxu0 0.0
        %496 = vmatprep.subr.mxu0 0.0
        %497 = vmatpush1.msra.mxu0 0.0
        %498 = vmatprep.subr.mxu0 0.0
        %499 = vmatpush1.msra.mxu0 0.0
        %500 = vmatprep.subr.mxu0 0.0
        %501 = vmatpush1.msra.mxu0 0.0
        %502 = vmatprep.subr.mxu0 0.0
        %503 = vmatpush1.msra.mxu0 0.0
        %504 = vmatprep.subr.mxu0 0.0
        %505 = vmatpush1.msra.mxu0 0.0
        %506 = vmatprep.subr.mxu0 0.0
        %507 = vmatpush1.msra.mxu0 0.0
        %508 = vmatprep.subr.mxu0 0.0
        %509 = vmatpush1.msra.mxu0 0.0
        %510 = vmatprep.subr.mxu0 0.0
        %511 = vmatpush1.msra.mxu0 0.0
        %512 = vmatprep.mubr.f32.mxu0 0.0
        %513 = vmatmul.mubr.f32.gmra.mrb[0].mxu0 %v443
        %v514 = vpop.f32.mrb[0].mxu0
        %v515 = vadd.f32 0.0, %v514
        %v516 = vpop.f32.mrb[0].mxu0
        %517 = vmatprep.mubr.f32.mxu0 0.0
        %518 = vmatmul.mubr.f32.gmra.mrb[0].mxu0 %v446
        %v519 = vpop.f32.mrb[0].mxu0
        %v520 = vadd.f32 0.0, %v519
        %v521 = vpop.f32.mrb[0].mxu0
        %522 = vdwg.mxu0
        %523 = vadd.xlane.f32.xlu0 %v515
        %v524 = vpop.xlane.xlu0 %523
        %525 = vadd.xlane.f32.xlu0 %v520
        %v526 = vpop.xlane.xlu0 %525
        %v527 = vmul.f32 %v524, 0.0078125
        %v528 = vmul.f32 %v526, 0.0078125
        %vm529 = vcmask 130048
        %v531 = vsel %vm529, %v437, 0
        %v534 = vsel %vm529, %v438, 0
        %v537 = vsel %vm529, %v439, 0
        %v540 = vsel %vm529, %v440, 0
        %542 = vmatprep.subr.mxu0 0.0
        %543 = vmatpush1.msra.mxu0 %v527
        %544 = vmatprep.subr.mxu0 0.0
        %545 = vmatpush1.msra.mxu0 %v528
        %546 = vmatprep.subr.mxu0 0.0
        %547 = vmatpush1.msra.mxu0 0.0
        %548 = vmatprep.subr.mxu0 0.0
        %549 = vmatpush1.msra.mxu0 0.0
        %550 = vmatprep.subr.mxu0 0.0
        %551 = vmatpush1.msra.mxu0 0.0
        %552 = vmatprep.subr.mxu0 0.0
        %553 = vmatpush1.msra.mxu0 0.0
        %554 = vmatprep.subr.mxu0 0.0
        %555 = vmatpush1.msra.mxu0 0.0
        %556 = vmatprep.subr.mxu0 0.0
        %557 = vmatpush1.msra.mxu0 0.0
        %558 = vmatprep.subr.mxu0 0.0
        %559 = vmatpush1.msra.mxu0 0.0
        %560 = vmatprep.subr.mxu0 0.0
        %561 = vmatpush1.msra.mxu0 0.0
        %562 = vmatprep.subr.mxu0 0.0
        %563 = vmatpush1.msra.mxu0 0.0
        %564 = vmatprep.subr.mxu0 0.0
        %565 = vmatpush1.msra.mxu0 0.0
        %566 = vmatprep.subr.mxu0 0.0
        %567 = vmatpush1.msra.mxu0 0.0
        %568 = vmatprep.subr.mxu0 0.0
        %569 = vmatpush1.msra.mxu0 0.0
        %570 = vmatprep.subr.mxu0 0.0
        %571 = vmatpush1.msra.mxu0 0.0
        %572 = vmatprep.subr.mxu0 0.0
        %573 = vmatpush1.msra.mxu0 0.0
        %574 = vmatprep.subr.mxu0 0.0
        %575 = vmatpush1.msra.mxu0 0.0
        %576 = vmatprep.subr.mxu0 0.0
        %577 = vmatpush1.msra.mxu0 0.0
        %578 = vmatprep.subr.mxu0 0.0
        %579 = vmatpush1.msra.mxu0 0.0
        %580 = vmatprep.subr.mxu0 0.0
        %581 = vmatpush1.msra.mxu0 0.0
        %582 = vmatprep.subr.mxu0 0.0
        %583 = vmatpush1.msra.mxu0 0.0
        %584 = vmatprep.subr.mxu0 0.0
        %585 = vmatpush1.msra.mxu0 0.0
        %586 = vmatprep.subr.mxu0 0.0
        %587 = vmatpush1.msra.mxu0 0.0
        %588 = vmatprep.subr.mxu0 0.0
        %589 = vmatpush1.msra.mxu0 0.0
        %590 = vmatprep.subr.mxu0 0.0
        %591 = vmatpush1.msra.mxu0 0.0
        %592 = vmatprep.subr.mxu0 0.0
        %593 = vmatpush1.msra.mxu0 0.0
        %594 = vmatprep.subr.mxu0 0.0
        %595 = vmatpush1.msra.mxu0 0.0
        %596 = vmatprep.subr.mxu0 0.0
        %597 = vmatpush1.msra.mxu0 0.0
        %598 = vmatprep.subr.mxu0 0.0
        %599 = vmatpush1.msra.mxu0 0.0
        %600 = vmatprep.subr.mxu0 0.0
        %601 = vmatpush1.msra.mxu0 0.0
        %602 = vmatprep.subr.mxu0 0.0
        %603 = vmatpush1.msra.mxu0 0.0
        %604 = vmatprep.subr.mxu0 0.0
        %605 = vmatpush1.msra.mxu0 0.0
        %606 = vmatprep.mubr.f32.mxu0 0.0
        %607 = vmatmul.mubr.f32.gmra.mrb[0].mxu0 %v531
        %v608 = vpop.f32.mrb[0].mxu0
        %v609 = vadd.f32 0.0, %v608
        %v610 = vpop.f32.mrb[0].mxu0
        %611 = vmatprep.mubr.f32.mxu0 0.0
        %612 = vmatmul.mubr.f32.gmra.mrb[0].mxu0 %v534
        %v613 = vpop.f32.mrb[0].mxu0
        %v614 = vadd.f32 0.0, %v613
        %v615 = vpop.f32.mrb[0].mxu0
        %616 = vmatprep.mubr.f32.mxu0 0.0
        %617 = vmatmul.mubr.f32.gmra.mrb[0].mxu0 %v537
        %v618 = vpop.f32.mrb[0].mxu0
        %v619 = vadd.f32 0.0, %v618
        %v620 = vpop.f32.mrb[0].mxu0
        %621 = vmatprep.mubr.f32.mxu0 0.0
        %622 = vmatmul.mubr.f32.gmra.mrb[0].mxu0 %v540
        %v623 = vpop.f32.mrb[0].mxu0
        %v624 = vadd.f32 0.0, %v623
        %v625 = vpop.f32.mrb[0].mxu0
        %626 = vdwg.mxu0
        %628 = vset.pattern.permute.xlu0 0
        %629 = vperm.xlu0 %628, %v609
        %v630 = vpop.permute.xlu0 %629
        %633 = vset.pattern.permute.xlu0 0
        %634 = vperm.xlu0 %633, %v614
        %v635 = vpop.permute.xlu0 %634
        %638 = vset.pattern.permute.xlu0 0
        %639 = vperm.xlu0 %638, %v619
        %v640 = vpop.permute.xlu0 %639
        %643 = vset.pattern.permute.xlu0 0
        %644 = vperm.xlu0 %643, %v624
        %v645 = vpop.permute.xlu0 %644
        %v647 = vsub.f32 %v431, %v630
        %v648 = vsub.f32 %v432, %v635
        %v649 = vsub.f32 %v433, %v640
        %v650 = vsub.f32 %v434, %v645
        %v651 = vlaneseq
        %v652 = vand.u32 %v651, 127
        %vm653 = vcmp.lt.s32.totalorder %v652, 64
        %v654 = vsel %vm653, %v647, 0.0
        %v655 = vsel %vm653, %v648, 0.0
        %v656 = vsel %vm653, %v649, 0.0
        %v657 = vsel %vm653, %v650, 0.0
        %v658 = vmul.f32 %v654, %v654
        %v659 = vmul.f32 %v655, %v655
        %v660 = vmul.f32 %v656, %v656
        %v661 = vmul.f32 %v657, %v657
        %662 = vmatprep.subr.mxu0 0.0
        %663 = vmatpush1.msra.mxu0 %v658
        %664 = vmatprep.subr.mxu0 0.0
        %665 = vmatpush1.msra.mxu0 %v659
        %666 = vmatprep.subr.mxu0 0.0
        %667 = vmatpush1.msra.mxu0 %v660
        %668 = vmatprep.subr.mxu0 0.0
        %669 = vmatpush1.msra.mxu0 %v661
        %670 = vmatprep.subr.mxu0 0.0
        %671 = vmatpush1.msra.mxu0 0.0
        %672 = vmatprep.subr.mxu0 0.0
        %673 = vmatpush1.msra.mxu0 0.0
        %674 = vmatprep.subr.mxu0 0.0
        %675 = vmatpush1.msra.mxu0 0.0
        %676 = vmatprep.subr.mxu0 0.0
        %677 = vmatpush1.msra.mxu0 0.0
        %678 = vmatprep.subr.mxu0 0.0
        %679 = vmatpush1.msra.mxu0 0.0
        %680 = vmatprep.subr.mxu0 0.0
        %681 = vmatpush1.msra.mxu0 0.0
        %682 = vmatprep.subr.mxu0 0.0
        %683 = vmatpush1.msra.mxu0 0.0
        %684 = vmatprep.subr.mxu0 0.0
        %685 = vmatpush1.msra.mxu0 0.0
        %686 = vmatprep.subr.mxu0 0.0
        %687 = vmatpush1.msra.mxu0 0.0
        %688 = vmatprep.subr.mxu0 0.0
        %689 = vmatpush1.msra.mxu0 0.0
        %690 = vmatprep.subr.mxu0 0.0
        %691 = vmatpush1.msra.mxu0 0.0
        %692 = vmatprep.subr.mxu0 0.0
        %693 = vmatpush1.msra.mxu0 0.0
        %694 = vmatprep.subr.mxu0 0.0
        %695 = vmatpush1.msra.mxu0 0.0
        %696 = vmatprep.subr.mxu0 0.0
        %697 = vmatpush1.msra.mxu0 0.0
        %698 = vmatprep.subr.mxu0 0.0
        %699 = vmatpush1.msra.mxu0 0.0
        %700 = vmatprep.subr.mxu0 0.0
        %701 = vmatpush1.msra.mxu0 0.0
        %702 = vmatprep.subr.mxu0 0.0
        %703 = vmatpush1.msra.mxu0 0.0
        %704 = vmatprep.subr.mxu0 0.0
        %705 = vmatpush1.msra.mxu0 0.0
        %706 = vmatprep.subr.mxu0 0.0
        %707 = vmatpush1.msra.mxu0 0.0
        %708 = vmatprep.subr.mxu0 0.0
        %709 = vmatpush1.msra.mxu0 0.0
        %710 = vmatprep.subr.mxu0 0.0
        %711 = vmatpush1.msra.mxu0 0.0
        %712 = vmatprep.subr.mxu0 0.0
        %713 = vmatpush1.msra.mxu0 0.0
        %714 = vmatprep.subr.mxu0 0.0
        %715 = vmatpush1.msra.mxu0 0.0
        %716 = vmatprep.subr.mxu0 0.0
        %717 = vmatpush1.msra.mxu0 0.0
        %718 = vmatprep.subr.mxu0 0.0
        %719 = vmatpush1.msra.mxu0 0.0
        %720 = vmatprep.subr.mxu0 0.0
        %721 = vmatpush1.msra.mxu0 0.0
        %722 = vmatprep.subr.mxu0 0.0
        %723 = vmatpush1.msra.mxu0 0.0
        %724 = vmatprep.subr.mxu0 0.0
        %725 = vmatpush1.msra.mxu0 0.0
        %726 = vmatprep.mubr.f32.mxu0 0.0
        %727 = vmatmul.mubr.f32.gmra.mrb[0].mxu0 %v443
        %v728 = vpop.f32.mrb[0].mxu0
        %v729 = vadd.f32 0.0, %v728
        %v730 = vpop.f32.mrb[0].mxu0
        %731 = vmatprep.mubr.f32.mxu0 0.0
        %732 = vmatmul.mubr.f32.gmra.mrb[0].mxu0 %v446
        %v733 = vpop.f32.mrb[0].mxu0
        %v734 = vadd.f32 0.0, %v733
        %v735 = vpop.f32.mrb[0].mxu0
        %736 = vdwg.mxu0
        %737 = vadd.xlane.f32.xlu0 %v729
        %v738 = vpop.xlane.xlu0 %737
        %739 = vadd.xlane.f32.xlu0 %v734
        %v740 = vpop.xlane.xlu0 %739
        %v741 = vmul.f32 %v738, 0.0078125
        %v742 = vmul.f32 %v740, 0.0078125
        %v743 = vadd.f32 %v741, 1e-05
        %v744 = vadd.f32 %v742, 1e-05
        %v745 = vrsqrt.pop %v743
        %v746 = vrsqrt.pop %v744
        %747 = vmatprep.subr.mxu0 0.0
        %748 = vmatpush1.msra.mxu0 %v745
        %749 = vmatprep.subr.mxu0 0.0
        %750 = vmatpush1.msra.mxu0 %v746
        %751 = vmatprep.subr.mxu0 0.0
        %752 = vmatpush1.msra.mxu0 0.0
        %753 = vmatprep.subr.mxu0 0.0
        %754 = vmatpush1.msra.mxu0 0.0
        %755 = vmatprep.subr.mxu0 0.0
        %756 = vmatpush1.msra.mxu0 0.0
        %757 = vmatprep.subr.mxu0 0.0
        %758 = vmatpush1.msra.mxu0 0.0
        %759 = vmatprep.subr.mxu0 0.0
        %760 = vmatpush1.msra.mxu0 0.0
        %761 = vmatprep.subr.mxu0 0.0
        %762 = vmatpush1.msra.mxu0 0.0
        %763 = vmatprep.subr.mxu0 0.0
        %764 = vmatpush1.msra.mxu0 0.0
        %765 = vmatprep.subr.mxu0 0.0
        %766 = vmatpush1.msra.mxu0 0.0
        %767 = vmatprep.subr.mxu0 0.0
        %768 = vmatpush1.msra.mxu0 0.0
        %769 = vmatprep.subr.mxu0 0.0
        %770 = vmatpush1.msra.mxu0 0.0
        %771 = vmatprep.subr.mxu0 0.0
        %772 = vmatpush1.msra.mxu0 0.0
        %773 = vmatprep.subr.mxu0 0.0
        %774 = vmatpush1.msra.mxu0 0.0
        %775 = vmatprep.subr.mxu0 0.0
        %776 = vmatpush1.msra.mxu0 0.0
        %777 = vmatprep.subr.mxu0 0.0
        %778 = vmatpush1.msra.mxu0 0.0
        %779 = vmatprep.subr.mxu0 0.0
        %780 = vmatpush1.msra.mxu0 0.0
        %781 = vmatprep.subr.mxu0 0.0
        %782 = vmatpush1.msra.mxu0 0.0
        %783 = vmatprep.subr.mxu0 0.0
        %784 = vmatpush1.msra.mxu0 0.0
        %785 = vmatprep.subr.mxu0 0.0
        %786 = vmatpush1.msra.mxu0 0.0
        %787 = vmatprep.subr.mxu0 0.0
        %788 = vmatpush1.msra.mxu0 0.0
        %789 = vmatprep.subr.mxu0 0.0
        %790 = vmatpush1.msra.mxu0 0.0
        %791 = vmatprep.subr.mxu0 0.0
        %792 = vmatpush1.msra.mxu0 0.0
        %793 = vmatprep.subr.mxu0 0.0
        %794 = vmatpush1.msra.mxu0 0.0
        %795 = vmatprep.subr.mxu0 0.0
        %796 = vmatpush1.msra.mxu0 0.0
        %797 = vmatprep.subr.mxu0 0.0
        %798 = vmatpush1.msra.mxu0 0.0
        %799 = vmatprep.subr.mxu0 0.0
        %800 = vmatpush1.msra.mxu0 0.0
        %801 = vmatprep.subr.mxu0 0.0
        %802 = vmatpush1.msra.mxu0 0.0
        %803 = vmatprep.subr.mxu0 0.0
        %804 = vmatpush1.msra.mxu0 0.0
        %805 = vmatprep.subr.mxu0 0.0
        %806 = vmatpush1.msra.mxu0 0.0
        %807 = vmatprep.subr.mxu0 0.0
        %808 = vmatpush1.msra.mxu0 0.0
        %809 = vmatprep.subr.mxu0 0.0
        %810 = vmatpush1.msra.mxu0 0.0
        %811 = vmatprep.mubr.f32.mxu0 0.0
        %812 = vmatmul.mubr.f32.gmra.mrb[0].mxu0 %v531
        %v813 = vpop.f32.mrb[0].mxu0
        %v814 = vadd.f32 0.0, %v813
        %v815 = vpop.f32.mrb[0].mxu0
        %816 = vmatprep.mubr.f32.mxu0 0.0
        %817 = vmatmul.mubr.f32.gmra.mrb[0].mxu0 %v534
        %v818 = vpop.f32.mrb[0].mxu0
        %v819 = vadd.f32 0.0, %v818
        %v820 = vpop.f32.mrb[0].mxu0
        %821 = vmatprep.mubr.f32.mxu0 0.0
        %822 = vmatmul.mubr.f32.gmra.mrb[0].mxu0 %v537
        %v823 = vpop.f32.mrb[0].mxu0
        %v824 = vadd.f32 0.0, %v823
        %v825 = vpop.f32.mrb[0].mxu0
        %826 = vmatprep.mubr.f32.mxu0 0.0
        %827 = vmatmul.mubr.f32.gmra.mrb[0].mxu0 %v540
        %v828 = vpop.f32.mrb[0].mxu0
        %v829 = vadd.f32 0.0, %v828
        %v830 = vpop.f32.mrb[0].mxu0
        %831 = vdwg.mxu0
        %v832 = vld [vmem:[%s3] sm:$0xff]
        %v833 = vld [vmem:[%s3 + $0x8] sm:$0xff]
        %v834 = vld [vmem:[%s3 + $0x10] sm:$0xff]
        %v835 = vld [vmem:[%s3 + $0x18] sm:$0xff]
        %v836 = vmul.f32 %v814, %v832
        %v837 = vmul.f32 %v819, %v833
        %v838 = vmul.f32 %v824, %v834
        %v839 = vmul.f32 %v829, %v835
        %841 = vset.pattern.permute.xlu0 0
        %842 = vperm.xlu0 %841, %v836
        %v843 = vpop.permute.xlu0 %842
        %846 = vset.pattern.permute.xlu0 0
        %847 = vperm.xlu0 %846, %v837
        %v848 = vpop.permute.xlu0 %847
        %851 = vset.pattern.permute.xlu0 0
        %852 = vperm.xlu0 %851, %v838
        %v853 = vpop.permute.xlu0 %852
        %856 = vset.pattern.permute.xlu0 0
        %857 = vperm.xlu0 %856, %v839
        %v858 = vpop.permute.xlu0 %857
        %v860 = vmul.f32 %v654, %v843
        %v861 = vmul.f32 %v655, %v848
        %v862 = vmul.f32 %v656, %v853
        %v863 = vmul.f32 %v657, %v858
        %865 = vset.pattern.permute.xlu0 1
        %866 = vperm.xlu0 %865, %v832
        %v867 = vpop.permute.xlu0 %866
        %870 = vset.pattern.permute.xlu0 1
        %871 = vperm.xlu0 %870, %v833
        %v872 = vpop.permute.xlu0 %871
        %875 = vset.pattern.permute.xlu0 1
        %876 = vperm.xlu0 %875, %v834
        %v877 = vpop.permute.xlu0 %876
        %880 = vset.pattern.permute.xlu0 1
        %881 = vperm.xlu0 %880, %v835
        %v882 = vpop.permute.xlu0 %881
        %v884 = vadd.f32 %v860, %v867
        %v885 = vadd.f32 %v861, %v872
        %v886 = vadd.f32 %v862, %v877
        %v887 = vadd.f32 %v863, %v882
        %v888 = vpack.c.bf16 %v885, %v884
        %v889 = vpack.c.bf16 %v887, %v886
        %v890 = vld [vmem:[%s4] sm:$0xf]
        %v891 = vld [vmem:[%s4 + $0x4] sm:$0xf]
        %v892 = vld [vmem:[%s4 + $0x8] sm:$0xf]
        %v893 = vld [vmem:[%s4 + $0xc] sm:$0xf]
        %v894 = vld [vmem:[%s7] sm:$0xff]
        %v895 = vld [vmem:[%s7 + $0x8] sm:$0xff]
        %v896 = vld [vmem:[%s7 + $0x10] sm:$0xff]
        %v897 = vld [vmem:[%s7 + $0x18] sm:$0xff]
        %899 = vset.pattern.permute.xlu0 0
        %900 = vperm.xlu0 %899, %v894
        %v901 = vpop.permute.xlu0 %900
        %904 = vset.pattern.permute.xlu0 0
        %905 = vperm.xlu0 %904, %v895
        %v906 = vpop.permute.xlu0 %905
        %909 = vset.pattern.permute.xlu0 0
        %910 = vperm.xlu0 %909, %v896
        %v911 = vpop.permute.xlu0 %910
        %914 = vset.pattern.permute.xlu0 0
        %915 = vperm.xlu0 %914, %v897
        %v916 = vpop.permute.xlu0 %915
        %v922 = vunpack.c.l.b16 %v890
        %v923 = vunpack.c.l.b16 %v891
        %v924 = vunpack.c.l.b16 %v892
        %v925 = vunpack.c.l.b16 %v893
        %v926 = vpack.c.b16 %v923, %v922
        %v927 = vpack.c.b16 %v925, %v924
        %v929 = vsel %vm441, %v926, 0
        %v932 = vsel %vm441, %v927, 0
        %934 = vmatprep.subr.bf16.mxu0 0
        %935 = vmatpush1.bf16.msra.mxu0 %v888
        %936 = vmatprep.subr.bf16.mxu0 0
        %937 = vmatpush1.bf16.msra.mxu0 %v889
        %938 = vmatprep.subr.bf16.mxu0 0
        %939 = vmatpush1.bf16.msra.mxu0 0
        %940 = vmatprep.subr.bf16.mxu0 0
        %941 = vmatpush1.bf16.msra.mxu0 0
        %942 = vmatprep.subr.bf16.mxu0 0
        %943 = vmatpush1.bf16.msra.mxu0 0
        %944 = vmatprep.subr.bf16.mxu0 0
        %945 = vmatpush1.bf16.msra.mxu0 0
        %946 = vmatprep.subr.bf16.mxu0 0
        %947 = vmatpush1.bf16.msra.mxu0 0
        %948 = vmatprep.subr.bf16.mxu0 0
        %949 = vmatpush1.bf16.msra.mxu0 0
        %950 = vmatprep.subr.bf16.mxu0 0
        %951 = vmatpush1.bf16.msra.mxu0 0
        %952 = vmatprep.subr.bf16.mxu0 0
        %953 = vmatpush1.bf16.msra.mxu0 0
        %954 = vmatprep.subr.bf16.mxu0 0
        %955 = vmatpush1.bf16.msra.mxu0 0
        %956 = vmatprep.subr.bf16.mxu0 0
        %957 = vmatpush1.bf16.msra.mxu0 0
        %958 = vmatprep.subr.bf16.mxu0 0
        %959 = vmatpush1.bf16.msra.mxu0 0
        %960 = vmatprep.subr.bf16.mxu0 0
        %961 = vmatpush1.bf16.msra.mxu0 0
        %962 = vmatprep.subr.bf16.mxu0 0
        %963 = vmatpush1.bf16.msra.mxu0 0
        %964 = vmatprep.subr.bf16.mxu0 0
        %965 = vmatpush1.bf16.msra.mxu0 0
        %966 = vmatprep.mubr.bf16.mxu0 0
        %967 = vmatmul.mubr.bf16.gmra.mrb[0].mxu0 %v929
        %v968 = vpop.f32.mrb[0].mxu0
        %v969 = vadd.f32 %v901, %v968
        %v970 = vpop.f32.mrb[0].mxu0
        %v971 = vpop.f32.mrb[0].mxu0
        %v972 = vadd.f32 %v906, %v971
        %v973 = vpop.f32.mrb[0].mxu0
        %974 = vmatprep.mubr.bf16.mxu0 0
        %975 = vmatmul.mubr.bf16.gmra.mrb[0].mxu0 %v932
        %v976 = vpop.f32.mrb[0].mxu0
        %v977 = vadd.f32 %v911, %v976
        %v978 = vpop.f32.mrb[0].mxu0
        %v979 = vpop.f32.mrb[0].mxu0
        %v980 = vadd.f32 %v916, %v979
        %v981 = vpop.f32.mrb[0].mxu0
        %982 = vdwg.mxu0
        %v983 = vpack.c.bf16 %v972, %v969
        %v984 = vpack.c.bf16 %v980, %v977
        %v987 = vunpack.c.l.b16 %v983
        %v988 = vunpack.c.h.b16 %v983
        %v989 = vunpack.c.l.b16 %v984
        %v990 = vunpack.c.h.b16 %v984
        %v991 = vpack.c.b16 %v987, %v987
        %v992 = vpack.c.b16 %v988, %v988
        %v993 = vpack.c.b16 %v989, %v989
        %v994 = vpack.c.b16 %v990, %v990
        %999 = vst [vmem:[%s410] sm:$0xf] %v991
        %1000 = vst [vmem:[%s410 + $0x4] sm:$0xf] %v992
        %1001 = vst [vmem:[%s410 + $0x8] sm:$0xf] %v993
        %1002 = vst [vmem:[%s410 + $0xc] sm:$0xf] %v994
        %v1003 = vld [vmem:[%s5] sm:$0xf]
        %v1004 = vld [vmem:[%s5 + $0x4] sm:$0xf]
        %v1005 = vld [vmem:[%s5 + $0x8] sm:$0xf]
        %v1006 = vld [vmem:[%s5 + $0xc] sm:$0xf]
        %v1007 = vld [vmem:[%s8] sm:$0xff]
        %v1008 = vld [vmem:[%s8 + $0x8] sm:$0xff]
        %v1009 = vld [vmem:[%s8 + $0x10] sm:$0xff]
        %v1010 = vld [vmem:[%s8 + $0x18] sm:$0xff]
        %1012 = vset.pattern.permute.xlu0 0
        %1013 = vperm.xlu0 %1012, %v1007
        %v1014 = vpop.permute.xlu0 %1013
        %1017 = vset.pattern.permute.xlu0 0
        %1018 = vperm.xlu0 %1017, %v1008
        %v1019 = vpop.permute.xlu0 %1018
        %1022 = vset.pattern.permute.xlu0 0
        %1023 = vperm.xlu0 %1022, %v1009
        %v1024 = vpop.permute.xlu0 %1023
        %1027 = vset.pattern.permute.xlu0 0
        %1028 = vperm.xlu0 %1027, %v1010
        %v1029 = vpop.permute.xlu0 %1028
        %v1035 = vunpack.c.l.b16 %v1003
        %v1036 = vunpack.c.l.b16 %v1004
        %v1037 = vunpack.c.l.b16 %v1005
        %v1038 = vunpack.c.l.b16 %v1006
        %v1039 = vpack.c.b16 %v1036, %v1035
        %v1040 = vpack.c.b16 %v1038, %v1037
        %v1042 = vsel %vm441, %v1039, 0
        %v1045 = vsel %vm441, %v1040, 0
        %1047 = vmatprep.subr.bf16.mxu0 0
        %1048 = vmatpush1.bf16.msra.mxu0 %v888
        %1049 = vmatprep.subr.bf16.mxu0 0
        %1050 = vmatpush1.bf16.msra.mxu0 %v889
        %1051 = vmatprep.subr.bf16.mxu0 0
        %1052 = vmatpush1.bf16.msra.mxu0 0
        %1053 = vmatprep.subr.bf16.mxu0 0
        %1054 = vmatpush1.bf16.msra.mxu0 0
        %1055 = vmatprep.subr.bf16.mxu0 0
        %1056 = vmatpush1.bf16.msra.mxu0 0
        %1057 = vmatprep.subr.bf16.mxu0 0
        %1058 = vmatpush1.bf16.msra.mxu0 0
        %1059 = vmatprep.subr.bf16.mxu0 0
        %1060 = vmatpush1.bf16.msra.mxu0 0
        %1061 = vmatprep.subr.bf16.mxu0 0
        %1062 = vmatpush1.bf16.msra.mxu0 0
        %1063 = vmatprep.subr.bf16.mxu0 0
        %1064 = vmatpush1.bf16.msra.mxu0 0
        %1065 = vmatprep.subr.bf16.mxu0 0
        %1066 = vmatpush1.bf16.msra.mxu0 0
        %1067 = vmatprep.subr.bf16.mxu0 0
        %1068 = vmatpush1.bf16.msra.mxu0 0
        %1069 = vmatprep.subr.bf16.mxu0 0
        %1070 = vmatpush1.bf16.msra.mxu0 0
        %1071 = vmatprep.subr.bf16.mxu0 0
        %1072 = vmatpush1.bf16.msra.mxu0 0
        %1073 = vmatprep.subr.bf16.mxu0 0
        %1074 = vmatpush1.bf16.msra.mxu0 0
        %1075 = vmatprep.subr.bf16.mxu0 0
        %1076 = vmatpush1.bf16.msra.mxu0 0
        %1077 = vmatprep.subr.bf16.mxu0 0
        %1078 = vmatpush1.bf16.msra.mxu0 0
        %1079 = vmatprep.mubr.bf16.mxu0 0
        %1080 = vmatmul.mubr.bf16.gmra.mrb[0].mxu0 %v1042
        %v1081 = vpop.f32.mrb[0].mxu0
        %v1082 = vadd.f32 %v1014, %v1081
        %v1083 = vpop.f32.mrb[0].mxu0
        %v1084 = vpop.f32.mrb[0].mxu0
        %v1085 = vadd.f32 %v1019, %v1084
        %v1086 = vpop.f32.mrb[0].mxu0
        %1087 = vmatprep.mubr.bf16.mxu0 0
        %1088 = vmatmul.mubr.bf16.gmra.mrb[0].mxu0 %v1045
        %v1089 = vpop.f32.mrb[0].mxu0
        %v1090 = vadd.f32 %v1024, %v1089
        %v1091 = vpop.f32.mrb[0].mxu0
        %v1092 = vpop.f32.mrb[0].mxu0
        %v1093 = vadd.f32 %v1029, %v1092
        %v1094 = vpop.f32.mrb[0].mxu0
        %1095 = vdwg.mxu0
        %v1096 = vpack.c.bf16 %v1085, %v1082
        %v1097 = vpack.c.bf16 %v1093, %v1090
        %v1100 = vunpack.c.l.b16 %v1096
        %v1101 = vunpack.c.h.b16 %v1096
        %v1102 = vunpack.c.l.b16 %v1097
        %v1103 = vunpack.c.h.b16 %v1097
        %v1104 = vpack.c.b16 %v1100, %v1100
        %v1105 = vpack.c.b16 %v1101, %v1101
        %v1106 = vpack.c.b16 %v1102, %v1102
        %v1107 = vpack.c.b16 %v1103, %v1103
        %1112 = vst [vmem:[%s417] sm:$0xf] %v1104
        %1113 = vst [vmem:[%s417 + $0x4] sm:$0xf] %v1105
        %1114 = vst [vmem:[%s417 + $0x8] sm:$0xf] %v1106
        %1115 = vst [vmem:[%s417 + $0xc] sm:$0xf] %v1107
        %v1116 = vld [vmem:[%s6] sm:$0xf]
        %v1117 = vld [vmem:[%s6 + $0x4] sm:$0xf]
        %v1118 = vld [vmem:[%s6 + $0x8] sm:$0xf]
        %v1119 = vld [vmem:[%s6 + $0xc] sm:$0xf]
        %v1120 = vld [vmem:[%s9] sm:$0xff]
        %v1121 = vld [vmem:[%s9 + $0x8] sm:$0xff]
        %v1122 = vld [vmem:[%s9 + $0x10] sm:$0xff]
        %v1123 = vld [vmem:[%s9 + $0x18] sm:$0xff]
        %1125 = vset.pattern.permute.xlu0 0
        %1126 = vperm.xlu0 %1125, %v1120
        %v1127 = vpop.permute.xlu0 %1126
        %1130 = vset.pattern.permute.xlu0 0
        %1131 = vperm.xlu0 %1130, %v1121
        %v1132 = vpop.permute.xlu0 %1131
        %1135 = vset.pattern.permute.xlu0 0
        %1136 = vperm.xlu0 %1135, %v1122
        %v1137 = vpop.permute.xlu0 %1136
        %1140 = vset.pattern.permute.xlu0 0
        %1141 = vperm.xlu0 %1140, %v1123
        %v1142 = vpop.permute.xlu0 %1141
        %v1148 = vunpack.c.l.b16 %v1116
        %v1149 = vunpack.c.l.b16 %v1117
        %v1150 = vunpack.c.l.b16 %v1118
        %v1151 = vunpack.c.l.b16 %v1119
        %v1152 = vpack.c.b16 %v1149, %v1148
        %v1153 = vpack.c.b16 %v1151, %v1150
        %v1155 = vsel %vm441, %v1152, 0
        %v1158 = vsel %vm441, %v1153, 0
        %1160 = vmatprep.subr.bf16.mxu0 0
        %1161 = vmatpush1.bf16.msra.mxu0 %v888
        %1162 = vmatprep.subr.bf16.mxu0 0
        %1163 = vmatpush1.bf16.msra.mxu0 %v889
        %1164 = vmatprep.subr.bf16.mxu0 0
        %1165 = vmatpush1.bf16.msra.mxu0 0
        %1166 = vmatprep.subr.bf16.mxu0 0
        %1167 = vmatpush1.bf16.msra.mxu0 0
        %1168 = vmatprep.subr.bf16.mxu0 0
        %1169 = vmatpush1.bf16.msra.mxu0 0
        %1170 = vmatprep.subr.bf16.mxu0 0
        %1171 = vmatpush1.bf16.msra.mxu0 0
        %1172 = vmatprep.subr.bf16.mxu0 0
        %1173 = vmatpush1.bf16.msra.mxu0 0
        %1174 = vmatprep.subr.bf16.mxu0 0
        %1175 = vmatpush1.bf16.msra.mxu0 0
        %1176 = vmatprep.subr.bf16.mxu0 0
        %1177 = vmatpush1.bf16.msra.mxu0 0
        %1178 = vmatprep.subr.bf16.mxu0 0
        %1179 = vmatpush1.bf16.msra.mxu0 0
        %1180 = vmatprep.subr.bf16.mxu0 0
        %1181 = vmatpush1.bf16.msra.mxu0 0
        %1182 = vmatprep.subr.bf16.mxu0 0
        %1183 = vmatpush1.bf16.msra.mxu0 0
        %1184 = vmatprep.subr.bf16.mxu0 0
        %1185 = vmatpush1.bf16.msra.mxu0 0
        %1186 = vmatprep.subr.bf16.mxu0 0
        %1187 = vmatpush1.bf16.msra.mxu0 0
        %1188 = vmatprep.subr.bf16.mxu0 0
        %1189 = vmatpush1.bf16.msra.mxu0 0
        %1190 = vmatprep.subr.bf16.mxu0 0
        %1191 = vmatpush1.bf16.msra.mxu0 0
        %1192 = vmatprep.mubr.bf16.mxu0 0
        %1193 = vmatmul.mubr.bf16.gmra.mrb[0].mxu0 %v1155
        %v1194 = vpop.f32.mrb[0].mxu0
        %v1195 = vadd.f32 %v1127, %v1194
        %v1196 = vpop.f32.mrb[0].mxu0
        %v1197 = vpop.f32.mrb[0].mxu0
        %v1198 = vadd.f32 %v1132, %v1197
        %v1199 = vpop.f32.mrb[0].mxu0
        %1200 = vmatprep.mubr.bf16.mxu0 0
        %1201 = vmatmul.mubr.bf16.gmra.mrb[0].mxu0 %v1158
        %v1202 = vpop.f32.mrb[0].mxu0
        %v1203 = vadd.f32 %v1137, %v1202
        %v1204 = vpop.f32.mrb[0].mxu0
        %v1205 = vpop.f32.mrb[0].mxu0
        %v1206 = vadd.f32 %v1142, %v1205
        %v1207 = vpop.f32.mrb[0].mxu0
        %1208 = vdwg.mxu0
        %v1209 = vpack.c.bf16 %v1198, %v1195
        %v1210 = vpack.c.bf16 %v1206, %v1203
        %v1213 = vunpack.c.l.b16 %v1209
        %v1214 = vunpack.c.h.b16 %v1209
        %v1215 = vunpack.c.l.b16 %v1210
        %v1216 = vunpack.c.h.b16 %v1210
        %v1217 = vpack.c.b16 %v1213, %v1213
        %v1218 = vpack.c.b16 %v1214, %v1214
        %v1219 = vpack.c.b16 %v1215, %v1215
        %v1220 = vpack.c.b16 %v1216, %v1216
        %1225 = vst [vmem:[%s424] sm:$0xf] %v1217
        %1226 = vst [vmem:[%s424 + $0x4] sm:$0xf] %v1218
        %1227 = vst [vmem:[%s424 + $0x8] sm:$0xf] %v1219
        %1228 = vst [vmem:[%s424 + $0xc] sm:$0xf] %v1220
        %s1229 = sand.u32 %s253, 1
        %s1230 = scalar_lea.sflag [#allocation3], %s1229
        %s1231 = sand.u32 %s253, 1
        %s1232 = smul.addr %s1231, 16
        %s1233 = scalar_lea.vmem [#allocation2], %s1232
        %s1234 = sand.u32 %s30, 1
        %s1235 = scalar_lea.sflag [#allocation5], %s1234
        %s1236 = sand.u32 %s279, 1
        %s1237 = smul.addr %s1236, 16
        %s1238 = scalar_lea.vmem [#allocation4], %s1237
        %s1239 = sand.u32 %s30, 1
        %s1240 = scalar_lea.sflag [#allocation5], %s1239
        %s1241 = sand.u32 %s305, 1
        %s1242 = smul.addr %s1241, 16
        %s1243 = scalar_lea.vmem [#allocation6], %s1242
        // Predicated region
        $region61: #{tpu_custom_call.1} parent=59 // pred_check
          %p1244 = pneg %p263
        $region62: #{tpu_custom_call.1} parent=59 // pred_check_branch
          %1246 = sbr.rel (%p1244) target = $region64
        $region63: #{tpu_custom_call.1} parent=59 // pred_region
          %s1248 = ssub.s32 256, 256
          %1249 = vsyncadd %s1230, %s1248
          %s1250 = smul.addr %s30, 4
          %s1251 = smul.addr %s1250, 64
          %s1252 = scalar_lea.hbm %s10, %s1251
          %s1253 = sshll.u32 %s1233, 4
          %s1254 = int_to_ptr.vmem [resolvable:$true] %s1253
          %1259 = dma.vmem_to_hbm [thread:$0]  %s1254, 256, %s1252, %s1230, 64, 64, 4
        $region64: #{tpu_custom_call.1} parent=59 // pred_fallthru
          _
        // Predicated region
        $region65: #{tpu_custom_call.1} parent=59 // pred_check
          %p1260 = pneg %p289
        $region66: #{tpu_custom_call.1} parent=59 // pred_check_branch
          %1262 = sbr.rel (%p1260) target = $region68
        $region67: #{tpu_custom_call.1} parent=59 // pred_region
          %s1264 = ssub.s32 256, 256
          %1265 = vsyncadd %s1235, %s1264
          %s1266 = smul.addr %s30, 4
          %s1267 = smul.addr %s1266, 64
          %s1268 = scalar_lea.hbm %s11, %s1267
          %s1269 = sshll.u32 %s1238, 4
          %s1270 = int_to_ptr.vmem [resolvable:$true] %s1269
          %1275 = dma.vmem_to_hbm [thread:$0]  %s1270, 256, %s1268, %s1235, 64, 64, 4
        $region68: #{tpu_custom_call.1} parent=59 // pred_fallthru
          _
        // Predicated region
        $region69: #{tpu_custom_call.1} parent=59 // pred_check
          %p1276 = pneg %p315
        $region70: #{tpu_custom_call.1} parent=59 // pred_check_branch
          %1278 = sbr.rel (%p1276) target = $region72
        $region71: #{tpu_custom_call.1} parent=59 // pred_region
          %s1280 = ssub.s32 256, 256
          %1281 = vsyncadd %s1240, %s1280
          %s1282 = smul.addr %s30, 4
          %s1283 = smul.addr %s1282, 64
          %s1284 = scalar_lea.hbm %s12, %s1283
          %s1285 = sshll.u32 %s1243, 4
          %s1286 = int_to_ptr.vmem [resolvable:$true] %s1285
          %1291 = dma.vmem_to_hbm [thread:$0]  %s1286, 256, %s1284, %s1240, 64, 64, 4
        $region72: #{tpu_custom_call.1} parent=59 // pred_fallthru
          _
      $region60: #{tpu_custom_call.1} parent=5 // pred_fallthru
        _
      %p1292 = scmp.le.s32.totalorder 2, %s25
      // Predicated region
      $region73: #{tpu_custom_call.1} parent=5 // pred_check
        %p1293 = pneg %p1292
      $region74: #{tpu_custom_call.1} parent=5 // pred_check_branch
        %1295 = sbr.rel (%p1293) target = $region76
      $region75: #{tpu_custom_call.1} parent=5 // pred_region
        %s1296 = ssub.s32 %s25, 2
        // Predicated region
        $region77: #{tpu_custom_call.1} parent=75 // pred_check
          %p1297 = pneg %p269
        $region78: #{tpu_custom_call.1} parent=75 // pred_check_branch
          %1299 = sbr.rel (%p1297) target = $region80
        $region79: #{tpu_custom_call.1} parent=75 // pred_region
          %s1300 = sand.u32 %s254, 1
          %s1301 = scalar_lea.sflag [#allocation3], %s1300
          %s1302 = sand.u32 %s254, 1
          %s1303 = smul.addr %s1302, 16
          %s1304 = scalar_lea.vmem [#allocation2], %s1303
          %1305 = dma.done %s1301, 256
        $region80: #{tpu_custom_call.1} parent=75 // pred_fallthru
          _
        // Predicated region
        $region81: #{tpu_custom_call.1} parent=75 // pred_check
          %p1306 = pneg %p295
        $region82: #{tpu_custom_call.1} parent=75 // pred_check_branch
          %1308 = sbr.rel (%p1306) target = $region84
        $region83: #{tpu_custom_call.1} parent=75 // pred_region
          %s1309 = sand.u32 %s31, 1
          %s1310 = scalar_lea.sflag [#allocation5], %s1309
          %s1311 = sand.u32 %s280, 1
          %s1312 = smul.addr %s1311, 16
          %s1313 = scalar_lea.vmem [#allocation4], %s1312
          %1314 = dma.done %s1310, 256
        $region84: #{tpu_custom_call.1} parent=75 // pred_fallthru
          _
        // Predicated region
        $region85: #{tpu_custom_call.1} parent=75 // pred_check
          %p1315 = pneg %p321
        $region86: #{tpu_custom_call.1} parent=75 // pred_check_branch
          %1317 = sbr.rel (%p1315) target = $region88
        $region87: #{tpu_custom_call.1} parent=75 // pred_region
          %s1318 = sand.u32 %s31, 1
          %s1319 = scalar_lea.sflag [#allocation5], %s1318
          %s1320 = sand.u32 %s306, 1
          %s1321 = smul.addr %s1320, 16
          %s1322 = scalar_lea.vmem [#allocation6], %s1321
          %1323 = dma.done %s1319, 256
        $region88: #{tpu_custom_call.1} parent=75 // pred_fallthru
          _
      $region76: #{tpu_custom_call.1} parent=5 // pred_fallthru
        _
    $region6: #{tpu_custom_call.1} parent=1 // loop_footer
      %s29 = sadd.s32 1, %s25
    $region7: #{tpu_custom_call.1} parent=1 // loop_footer_branch
      %24 = sbr.rel target = $region3
    $region8: #{tpu_custom_call.1} parent=1 // loop_exit
      _
    %1324 = vsyncpa [#allocation3], 1
    %s1325 = scalar_lea.sflag [#allocation3], 1
    %1326 = vsyncpa %s1325, 1
    %1327 = vsyncpa [#allocation5], 1
    %s1328 = scalar_lea.sflag [#allocation5], 1
    %1329 = vsyncpa %s1328, 1

</llo_original>
